<compile_context>
chip_gen: v7x
topology: tpu7x:2x2x1
jax: 0.10.0
libtpu: 0.0.40
codegen_flags: <defaults>
</compile_context>

<pallas_src>
import jax
import jax.numpy as jnp
from jax.experimental import pallas as pl
from jax.experimental.pallas import tpu as pltpu

# ----------------------------------------------------------------------------
# Synthetic config (stands in for the pretrained reranker base's config)
# ----------------------------------------------------------------------------
B = 2            # batch
S = 8            # sequence length
H = 32           # hidden size
NUM_HEADS = 2
HEAD_DIM = H // NUM_HEADS
FFN = 64         # intermediate size
VOCAB = 64
LAYERS = 2
EPS = 1e-12
NEG_INF = -1e9       # additive-mask constant (f32 path only)
OUT_LANES = 128      # lane-dense head-output width

W_NAMES = ('wq', 'bq', 'wk', 'bk', 'wv', 'bv', 'wo', 'bo',
           'ln1g', 'ln1b', 'w1', 'b1', 'w2', 'b2', 'ln2g', 'ln2b')


def _layer_norm(x, g, b):
    mu = jnp.mean(x, axis=-1, keepdims=True)
    var = jnp.mean((x - mu) ** 2, axis=-1, keepdims=True)
    return (x - mu) * jax.lax.rsqrt(var + EPS) * g + b


# ----------------------------------------------------------------------------
# Fused Pallas kernel: LAYERS encoder blocks (grid axis) + regression head
# ----------------------------------------------------------------------------
def fused_encoder_head_kernel(
        x_emb_ref, addmask_ref,
        wq_ref, bq_ref, wk_ref, bk_ref, wv_ref, bv_ref,
        wo_ref, bo_ref, ln1g_ref, ln1b_ref,
        w1_ref, b1_ref, w2_ref, b2_ref, ln2g_ref, ln2b_ref,
        regw_ref, regb_ref,
        out_ref,
        x_sc):
    l = pl.program_id(0)

    # Load embeddings into the resident VMEM activation buffer on the first layer.
    @pl.when(l == 0)
    def _():
        x_sc[...] = x_emb_ref[...].astype(jnp.float32)

    x = x_sc[...]                               # (B, S, H) f32, resident across layers
    add_mask = addmask_ref[...][:, None, :]     # (B, 1, S) additive mask (precomputed)

    wq, bq = wq_ref[0], bq_ref[0]               # (H, H), (1, H)
    wk, bk = wk_ref[0], bk_ref[0]
    wv, bv = wv_ref[0], bv_ref[0]
    wo, bo = wo_ref[0], bo_ref[0]

    q = jnp.einsum('bsh,hd->bsd', x, wq, preferred_element_type=jnp.float32) + bq
    k = jnp.einsum('bsh,hd->bsd', x, wk, preferred_element_type=jnp.float32) + bk
    v = jnp.einsum('bsh,hd->bsd', x, wv, preferred_element_type=jnp.float32) + bv

    scale = 1.0 / jnp.sqrt(jnp.float32(HEAD_DIM))

    ctx_heads = []
    for h in range(NUM_HEADS):                  # static loop; heads fit in one vreg at H=32
        sl = slice(h * HEAD_DIM, (h + 1) * HEAD_DIM)
        qh, kh, vh = q[..., sl], k[..., sl], v[..., sl]
        s = jnp.einsum('bqd,bkd->bqk', qh, kh,
                       preferred_element_type=jnp.float32) * scale
        s = s + add_mask
        m = jnp.max(s, axis=-1, keepdims=True)
        e = jnp.exp(s - m)                      # EUP
        denom_inv = pl.reciprocal(jnp.sum(e, axis=-1, keepdims=True), approx=True)
        p = e * denom_inv
        ctx_heads.append(jnp.einsum('bqk,bkd->bqd', p, vh,
                                    preferred_element_type=jnp.float32))
    ctx = jnp.concatenate(ctx_heads, axis=-1)   # (B, S, H)

    attn_out = jnp.einsum('bsh,hd->bsd', ctx, wo,
                          preferred_element_type=jnp.float32) + bo
    x1 = _layer_norm(x + attn_out, ln1g_ref[0], ln1b_ref[0])

    hdn = jnp.einsum('bsh,hf->bsf', x1, w1_ref[0],
                     preferred_element_type=jnp.float32) + b1_ref[0]
    hdn = jax.nn.gelu(hdn, approximate=True)
    hdn = jnp.einsum('bsf,fh->bsh', hdn, w2_ref[0],
                     preferred_element_type=jnp.float32) + b2_ref[0]
    x2 = _layer_norm(x1 + hdn, ln2g_ref[0], ln2b_ref[0])

    x_sc[...] = x2                              # carry activations to next layer (VMEM only)

    # Regression head on the last layer: CLS -> Linear(H,1) -> Sigmoid.
    # Output is written lane-dense (B, OUT_LANES); wrapper picks lane 0.
    @pl.when(l == pl.num_programs(0) - 1)
    def _():
        cls = x2[:, 0, :]                                              # (B, H)
        score = jnp.sum(cls * regw_ref[...], axis=-1, keepdims=True)   # (B, 1)
        score = score + regb_ref[...]                                  # + (1, 1) bias
        prob = 1.0 / (1.0 + jnp.exp(-score))                           # sigmoid (EUP)
        out_ref[...] = jnp.broadcast_to(prob, out_ref.shape).astype(out_ref.dtype)


# ----------------------------------------------------------------------------
# pallas_call wrapper: one kernel for the whole forward (encoder + head)
# ----------------------------------------------------------------------------
def fused_forward(x_emb, add_mask, layers, reg_w, reg_b):
    stacked = [layers[n] for n in W_NAMES]

    def full_spec(a):
        nd = a.ndim
        return pl.BlockSpec(a.shape, lambda l, _nd=nd: (0,) * _nd)

    def layer_spec(a):
        nd = a.ndim
        return pl.BlockSpec((1,) + a.shape[1:],
                            lambda l, _nd=nd: (l,) + (0,) * (_nd - 1))

    in_specs = ([full_spec(x_emb), full_spec(add_mask)]
                + [layer_spec(a) for a in stacked]
                + [full_spec(reg_w), full_spec(reg_b)])

    return pl.pallas_call(
        fused_encoder_head_kernel,
        out_shape=jax.ShapeDtypeStruct((B, OUT_LANES), jnp.float32),
        grid_spec=pltpu.PrefetchScalarGridSpec(
            num_scalar_prefetch=0,
            grid=(LAYERS,),
            in_specs=in_specs,
            out_specs=pl.BlockSpec((B, OUT_LANES), lambda l: (0, 0)),
            scratch_shapes=[pltpu.VMEM((B, S, H), jnp.float32)],
        ),
        compiler_params=pltpu.CompilerParams(
            dimension_semantics=("arbitrary",)),   # layer axis is sequential
    )(x_emb, add_mask, *stacked, reg_w, reg_b)


# ----------------------------------------------------------------------------
# Deterministic parameter init (per-layer weights stacked along a leading axis)
# ----------------------------------------------------------------------------
def init_params(key):
    keys = iter(jax.random.split(key, 8 * LAYERS + 8))

    def nrm(shape, scale=0.02):
        return (scale * jax.random.normal(next(keys), shape)).astype(jnp.float32)

    per_layer = []
    for _ in range(LAYERS):
        per_layer.append({
            'wq': nrm((H, H)), 'bq': jnp.zeros((1, H), jnp.float32),
            'wk': nrm((H, H)), 'bk': jnp.zeros((1, H), jnp.float32),
            'wv': nrm((H, H)), 'bv': jnp.zeros((1, H), jnp.float32),
            'wo': nrm((H, H)), 'bo': jnp.zeros((1, H), jnp.float32),
            'ln1g': jnp.ones((1, H), jnp.float32), 'ln1b': jnp.zeros((1, H), jnp.float32),
            'w1': nrm((H, FFN)), 'b1': jnp.zeros((1, FFN), jnp.float32),
            'w2': nrm((FFN, H)), 'b2': jnp.zeros((1, H), jnp.float32),
            'ln2g': jnp.ones((1, H), jnp.float32), 'ln2b': jnp.zeros((1, H), jnp.float32),
        })
    layers = {k: jnp.stack([lp[k] for lp in per_layer], axis=0) for k in W_NAMES}

    return {
        'tok_emb': nrm((VOCAB, H)),
        'pos_emb': nrm((S, H)),
        'emb_ln_g': jnp.ones((H,), jnp.float32),
        'emb_ln_b': jnp.zeros((H,), jnp.float32),
        'layers': layers,
        'reg_w': nrm((1, H)),                        # nn.Linear(hidden_size, 1)
        'reg_b': jnp.zeros((1, 1), jnp.float32),
    }


# ----------------------------------------------------------------------------
# Full forward pass: base encoder -> CLS -> Linear -> Sigmoid -> squeeze
# ----------------------------------------------------------------------------
def reranker_regressor_forward(params, input_ids, attention_mask):
    # Embedding lookup + embedding layernorm (plain-JAX glue; gather has no clean
    # single-kernel Pallas equivalent at this size).
    x = params['tok_emb'][input_ids] + params['pos_emb'][None, :, :]
    x = _layer_norm(x.astype(jnp.float32), params['emb_ln_g'], params['emb_ln_b'])

    # Additive attention mask computed once here (hoisted out of the kernel body).
    add_mask = (1.0 - attention_mask.astype(jnp.float32)) * NEG_INF        # (B, S)

    scores = fused_forward(x, add_mask, params['layers'],
                           params['reg_w'], params['reg_b'])               # (B, 128)
    return scores[:, 0]                                                    # == .squeeze() -> (B,)


if __name__ == "__main__":
    key = jax.random.PRNGKey(0)
    pkey, ikey = jax.random.split(key)
    params = init_params(pkey)

    input_ids = jax.random.randint(ikey, (B, S), 0, VOCAB, dtype=jnp.int32)
    attention_mask = jnp.ones((B, S), dtype=jnp.int32).at[:, S - 2:].set(0)  # pad last 2 tokens

    fwd = jax.jit(reranker_regressor_forward)
    out = fwd(params, input_ids, attention_mask)
    jax.block_until_ready(out)
    assert out.shape == (B,)
    assert bool(jnp.all(jnp.isfinite(out)))
    print("KERNEL_OK")
</pallas_src>

<mosaic_0001>
module attributes {stable_mosaic.version = 11 : i64} {
  func.func @fused_encoder_head_kernel(%arg0: i32, %arg1: memref<2x8x32xf32, #tpu.memory_space<vmem>>, %arg2: memref<2x8xf32, #tpu.memory_space<vmem>>, %arg3: memref<1x32x32xf32, #tpu.memory_space<vmem>>, %arg4: memref<1x1x32xf32, #tpu.memory_space<vmem>>, %arg5: memref<1x32x32xf32, #tpu.memory_space<vmem>>, %arg6: memref<1x1x32xf32, #tpu.memory_space<vmem>>, %arg7: memref<1x32x32xf32, #tpu.memory_space<vmem>>, %arg8: memref<1x1x32xf32, #tpu.memory_space<vmem>>, %arg9: memref<1x32x32xf32, #tpu.memory_space<vmem>>, %arg10: memref<1x1x32xf32, #tpu.memory_space<vmem>>, %arg11: memref<1x1x32xf32, #tpu.memory_space<vmem>>, %arg12: memref<1x1x32xf32, #tpu.memory_space<vmem>>, %arg13: memref<1x32x64xf32, #tpu.memory_space<vmem>>, %arg14: memref<1x1x64xf32, #tpu.memory_space<vmem>>, %arg15: memref<1x64x32xf32, #tpu.memory_space<vmem>>, %arg16: memref<1x1x32xf32, #tpu.memory_space<vmem>>, %arg17: memref<1x1x32xf32, #tpu.memory_space<vmem>>, %arg18: memref<1x1x32xf32, #tpu.memory_space<vmem>>, %arg19: memref<1x32xf32, #tpu.memory_space<vmem>>, %arg20: memref<1x1xf32, #tpu.memory_space<vmem>>, %arg21: memref<2x128xf32, #tpu.memory_space<vmem>>, %arg22: memref<2x8x32xf32, #tpu.memory_space<vmem>>) attributes {dimension_semantics = [#tpu.dimension_semantics<arbitrary>], iteration_bounds = array<i64: 2>, scalar_prefetch = 0 : i64, scratch_operands = 1 : i64, tpu.core_type = #tpu.core_type<tc>, window_params = [{pipeline_mode = #tpu.pipeline_mode<synchronous>, transform_indices = @transform_0, window_bounds = array<i64: 2, 8, 32>}, {pipeline_mode = #tpu.pipeline_mode<synchronous>, transform_indices = @transform_1, window_bounds = array<i64: 2, 8>}, {transform_indices = @transform_2, window_bounds = array<i64: 1, 32, 32>}, {transform_indices = @transform_3, window_bounds = array<i64: 1, 1, 32>}, {transform_indices = @transform_4, window_bounds = array<i64: 1, 32, 32>}, {transform_indices = @transform_5, window_bounds = array<i64: 1, 1, 32>}, {transform_indices = @transform_6, window_bounds = array<i64: 1, 32, 32>}, {transform_indices = @transform_7, window_bounds = array<i64: 1, 1, 32>}, {transform_indices = @transform_8, window_bounds = array<i64: 1, 32, 32>}, {transform_indices = @transform_9, window_bounds = array<i64: 1, 1, 32>}, {transform_indices = @transform_10, window_bounds = array<i64: 1, 1, 32>}, {transform_indices = @transform_11, window_bounds = array<i64: 1, 1, 32>}, {transform_indices = @transform_12, window_bounds = array<i64: 1, 32, 64>}, {transform_indices = @transform_13, window_bounds = array<i64: 1, 1, 64>}, {transform_indices = @transform_14, window_bounds = array<i64: 1, 64, 32>}, {transform_indices = @transform_15, window_bounds = array<i64: 1, 1, 32>}, {transform_indices = @transform_16, window_bounds = array<i64: 1, 1, 32>}, {transform_indices = @transform_17, window_bounds = array<i64: 1, 1, 32>}, {pipeline_mode = #tpu.pipeline_mode<synchronous>, transform_indices = @transform_18, window_bounds = array<i64: 1, 32>}, {pipeline_mode = #tpu.pipeline_mode<synchronous>, transform_indices = @transform_19, window_bounds = array<i64: 1, 1>}, {pipeline_mode = #tpu.pipeline_mode<synchronous>, transform_indices = @transform_20, window_bounds = array<i64: 2, 128>}]} {
    %c0_i32 = arith.constant 0 : i32
    %0 = arith.cmpi eq, %arg0, %c0_i32 : i32
    %1 = arith.extui %0 : i1 to i32
    %c0_i32_0 = arith.constant 0 : i32
    %2 = arith.cmpi ne, %1, %c0_i32_0 : i32
    scf.if %2 {
      %c0_86 = arith.constant 0 : index
      %c0_87 = arith.constant 0 : index
      %c0_88 = arith.constant 0 : index
      %170 = vector.load %arg1[%c0_86, %c0_87, %c0_88] : memref<2x8x32xf32, #tpu.memory_space<vmem>>, vector<2x8x32xf32>
      %c0_89 = arith.constant 0 : index
      %c0_90 = arith.constant 0 : index
      %c0_91 = arith.constant 0 : index
      %171 = vector.load %arg22[%c0_89, %c0_90, %c0_91] : memref<2x8x32xf32, #tpu.memory_space<vmem>>, vector<2x8x32xf32>
      tpu.vector_store %arg22[%c0_89, %c0_90, %c0_91], %170 {strides = array<i32>} : memref<2x8x32xf32, #tpu.memory_space<vmem>>, vector<2x8x32xf32>,
    } else {
    }
    %c0 = arith.constant 0 : index
    %c0_1 = arith.constant 0 : index
    %c0_2 = arith.constant 0 : index
    %3 = vector.load %arg22[%c0, %c0_1, %c0_2] : memref<2x8x32xf32, #tpu.memory_space<vmem>>, vector<2x8x32xf32>
    %c0_3 = arith.constant 0 : index
    %c0_4 = arith.constant 0 : index
    %4 = vector.load %arg2[%c0_3, %c0_4] : memref<2x8xf32, #tpu.memory_space<vmem>>, vector<2x8xf32>
    %5 = vector.shape_cast %4 : vector<2x8xf32> to vector<2x1x8xf32>
    %c0_5 = arith.constant 0 : index
    %c0_6 = arith.constant 0 : index
    %c0_7 = arith.constant 0 : index
    %6 = vector.load %arg3[%c0_5, %c0_6, %c0_7] : memref<1x32x32xf32, #tpu.memory_space<vmem>>, vector<1x32x32xf32>
    %7 = vector.shape_cast %6 : vector<1x32x32xf32> to vector<32x32xf32>
    %c0_8 = arith.constant 0 : index
    %c0_9 = arith.constant 0 : index
    %c0_10 = arith.constant 0 : index
    %8 = vector.load %arg4[%c0_8, %c0_9, %c0_10] : memref<1x1x32xf32, #tpu.memory_space<vmem>>, vector<1x1x32xf32>
    %9 = vector.shape_cast %8 : vector<1x1x32xf32> to vector<1x32xf32>
    %c0_11 = arith.constant 0 : index
    %c0_12 = arith.constant 0 : index
    %c0_13 = arith.constant 0 : index
    %10 = vector.load %arg5[%c0_11, %c0_12, %c0_13] : memref<1x32x32xf32, #tpu.memory_space<vmem>>, vector<1x32x32xf32>
    %11 = vector.shape_cast %10 : vector<1x32x32xf32> to vector<32x32xf32>
    %c0_14 = arith.constant 0 : index
    %c0_15 = arith.constant 0 : index
    %c0_16 = arith.constant 0 : index
    %12 = vector.load %arg6[%c0_14, %c0_15, %c0_16] : memref<1x1x32xf32, #tpu.memory_space<vmem>>, vector<1x1x32xf32>
    %13 = vector.shape_cast %12 : vector<1x1x32xf32> to vector<1x32xf32>
    %c0_17 = arith.constant 0 : index
    %c0_18 = arith.constant 0 : index
    %c0_19 = arith.constant 0 : index
    %14 = vector.load %arg7[%c0_17, %c0_18, %c0_19] : memref<1x32x32xf32, #tpu.memory_space<vmem>>, vector<1x32x32xf32>
    %15 = vector.shape_cast %14 : vector<1x32x32xf32> to vector<32x32xf32>
    %c0_20 = arith.constant 0 : index
    %c0_21 = arith.constant 0 : index
    %c0_22 = arith.constant 0 : index
    %16 = vector.load %arg8[%c0_20, %c0_21, %c0_22] : memref<1x1x32xf32, #tpu.memory_space<vmem>>, vector<1x1x32xf32>
    %17 = vector.shape_cast %16 : vector<1x1x32xf32> to vector<1x32xf32>
    %c0_23 = arith.constant 0 : index
    %c0_24 = arith.constant 0 : index
    %c0_25 = arith.constant 0 : index
    %18 = vector.load %arg9[%c0_23, %c0_24, %c0_25] : memref<1x32x32xf32, #tpu.memory_space<vmem>>, vector<1x32x32xf32>
    %19 = vector.shape_cast %18 : vector<1x32x32xf32> to vector<32x32xf32>
    %c0_26 = arith.constant 0 : index
    %c0_27 = arith.constant 0 : index
    %c0_28 = arith.constant 0 : index
    %20 = vector.load %arg10[%c0_26, %c0_27, %c0_28] : memref<1x1x32xf32, #tpu.memory_space<vmem>>, vector<1x1x32xf32>
    %21 = vector.shape_cast %20 : vector<1x1x32xf32> to vector<1x32xf32>
    "tpu.trace_start"() <{level = 10 : i32, message = "bsh,hd->bsd"}> : () -> ()
    %cst = arith.constant dense<0.000000e+00> : vector<2x8x32xf32>
    %22 = tpu.matmul %3, %7, %cst {dimension_numbers = #tpu.dot_dimension_numbers<[2], [0], [0, 1], [1], [0, 0, 0, 1, 1, 1], [], []>} : vector<2x8x32xf32>, vector<32x32xf32>, vector<2x8x32xf32> -> vector<2x8x32xf32>
    "tpu.trace_stop"() : () -> ()
    %23 = vector.shape_cast %9 : vector<1x32xf32> to vector<1x1x32xf32>
    %24 = vector.broadcast %23 : vector<1x1x32xf32> to vector<2x8x32xf32>
    %25 = arith.addf %22, %24 : vector<2x8x32xf32>
    "tpu.trace_start"() <{level = 10 : i32, message = "bsh,hd->bsd"}> : () -> ()
    %cst_29 = arith.constant dense<0.000000e+00> : vector<2x8x32xf32>
    %26 = tpu.matmul %3, %11, %cst_29 {dimension_numbers = #tpu.dot_dimension_numbers<[2], [0], [0, 1], [1], [0, 0, 0, 1, 1, 1], [], []>} : vector<2x8x32xf32>, vector<32x32xf32>, vector<2x8x32xf32> -> vector<2x8x32xf32>
    "tpu.trace_stop"() : () -> ()
    %27 = vector.shape_cast %13 : vector<1x32xf32> to vector<1x1x32xf32>
    %28 = vector.broadcast %27 : vector<1x1x32xf32> to vector<2x8x32xf32>
    %29 = arith.addf %26, %28 : vector<2x8x32xf32>
    "tpu.trace_start"() <{level = 10 : i32, message = "bsh,hd->bsd"}> : () -> ()
    %cst_30 = arith.constant dense<0.000000e+00> : vector<2x8x32xf32>
    %30 = tpu.matmul %3, %15, %cst_30 {dimension_numbers = #tpu.dot_dimension_numbers<[2], [0], [0, 1], [1], [0, 0, 0, 1, 1, 1], [], []>} : vector<2x8x32xf32>, vector<32x32xf32>, vector<2x8x32xf32> -> vector<2x8x32xf32>
    "tpu.trace_stop"() : () -> ()
    %31 = vector.shape_cast %17 : vector<1x32xf32> to vector<1x1x32xf32>
    %32 = vector.broadcast %31 : vector<1x1x32xf32> to vector<2x8x32xf32>
    %33 = arith.addf %30, %32 : vector<2x8x32xf32>
    %cst_31 = arith.constant 1.600000e+01 : f32
    %34 = math.sqrt %cst_31 : f32
    %cst_32 = arith.constant 1.000000e+00 : f32
    %35 = arith.divf %cst_32, %34 : f32
    %36 = vector.extract_strided_slice %25 {offsets = [0, 0, 0], sizes = [2, 8, 16], strides = [1, 1, 1]} : vector<2x8x32xf32> to vector<2x8x16xf32>
    %37 = vector.extract_strided_slice %29 {offsets = [0, 0, 0], sizes = [2, 8, 16], strides = [1, 1, 1]} : vector<2x8x32xf32> to vector<2x8x16xf32>
    %38 = vector.extract_strided_slice %33 {offsets = [0, 0, 0], sizes = [2, 8, 16], strides = [1, 1, 1]} : vector<2x8x32xf32> to vector<2x8x16xf32>
    "tpu.trace_start"() <{level = 10 : i32, message = "bqd,bkd->bqk"}> : () -> ()
    %cst_33 = arith.constant dense<0.000000e+00> : vector<2x8x8xf32>
    %39 = tpu.matmul %36, %37, %cst_33 {dimension_numbers = #tpu.dot_dimension_numbers<[2], [2], [1], [1], [0, 0, 0, 1, 1, 1], [0], [0]>} : vector<2x8x16xf32>, vector<2x8x16xf32>, vector<2x8x8xf32> -> vector<2x8x8xf32>
    "tpu.trace_stop"() : () -> ()
    %40 = vector.broadcast %35 : f32 to vector<2x8x8xf32>
    %41 = arith.mulf %39, %40 : vector<2x8x8xf32>
    %42 = vector.broadcast %5 : vector<2x1x8xf32> to vector<2x8x8xf32>
    %43 = arith.addf %41, %42 : vector<2x8x8xf32>
    %cst_34 = arith.constant dense<0xFF800000> : vector<2x8xf32>
    %44 = vector.multi_reduction <maximumf>, %43, %cst_34 [2] : vector<2x8x8xf32> to vector<2x8xf32>
    %45 = vector.shape_cast %44 : vector<2x8xf32> to vector<2x8x1xf32>
    %46 = vector.broadcast %45 : vector<2x8x1xf32> to vector<2x8x8xf32>
    %47 = arith.subf %43, %46 : vector<2x8x8xf32>
    %48 = math.exp %47 : vector<2x8x8xf32>
    %cst_35 = arith.constant dense<0.000000e+00> : vector<2x8xf32>
    %49 = vector.multi_reduction <add>, %48, %cst_35 [2] : vector<2x8x8xf32> to vector<2x8xf32>
    %50 = vector.shape_cast %49 : vector<2x8xf32> to vector<2x8x1xf32>
    %51 = tpu.reciprocal %50 {approx = true} : vector<2x8x1xf32> -> vector<2x8x1xf32>
    %52 = vector.broadcast %51 : vector<2x8x1xf32> to vector<2x8x8xf32>
    %53 = arith.mulf %48, %52 : vector<2x8x8xf32>
    "tpu.trace_start"() <{level = 10 : i32, message = "bqk,bkd->bqd"}> : () -> ()
    %cst_36 = arith.constant dense<0.000000e+00> : vector<2x8x16xf32>
    %54 = tpu.matmul %53, %38, %cst_36 {dimension_numbers = #tpu.dot_dimension_numbers<[2], [1], [1], [2], [0, 0, 0, 1, 1, 2], [0], [0]>} : vector<2x8x8xf32>, vector<2x8x16xf32>, vector<2x8x16xf32> -> vector<2x8x16xf32>
    "tpu.trace_stop"() : () -> ()
    %55 = vector.extract_strided_slice %25 {offsets = [0, 0, 16], sizes = [2, 8, 16], strides = [1, 1, 1]} : vector<2x8x32xf32> to vector<2x8x16xf32>
    %56 = vector.extract_strided_slice %29 {offsets = [0, 0, 16], sizes = [2, 8, 16], strides = [1, 1, 1]} : vector<2x8x32xf32> to vector<2x8x16xf32>
    %57 = vector.extract_strided_slice %33 {offsets = [0, 0, 16], sizes = [2, 8, 16], strides = [1, 1, 1]} : vector<2x8x32xf32> to vector<2x8x16xf32>
    "tpu.trace_start"() <{level = 10 : i32, message = "bqd,bkd->bqk"}> : () -> ()
    %cst_37 = arith.constant dense<0.000000e+00> : vector<2x8x8xf32>
    %58 = tpu.matmul %55, %56, %cst_37 {dimension_numbers = #tpu.dot_dimension_numbers<[2], [2], [1], [1], [0, 0, 0, 1, 1, 1], [0], [0]>} : vector<2x8x16xf32>, vector<2x8x16xf32>, vector<2x8x8xf32> -> vector<2x8x8xf32>
    "tpu.trace_stop"() : () -> ()
    %59 = vector.broadcast %35 : f32 to vector<2x8x8xf32>
    %60 = arith.mulf %58, %59 : vector<2x8x8xf32>
    %61 = vector.broadcast %5 : vector<2x1x8xf32> to vector<2x8x8xf32>
    %62 = arith.addf %60, %61 : vector<2x8x8xf32>
    %cst_38 = arith.constant dense<0xFF800000> : vector<2x8xf32>
    %63 = vector.multi_reduction <maximumf>, %62, %cst_38 [2] : vector<2x8x8xf32> to vector<2x8xf32>
    %64 = vector.shape_cast %63 : vector<2x8xf32> to vector<2x8x1xf32>
    %65 = vector.broadcast %64 : vector<2x8x1xf32> to vector<2x8x8xf32>
    %66 = arith.subf %62, %65 : vector<2x8x8xf32>
    %67 = math.exp %66 : vector<2x8x8xf32>
    %cst_39 = arith.constant dense<0.000000e+00> : vector<2x8xf32>
    %68 = vector.multi_reduction <add>, %67, %cst_39 [2] : vector<2x8x8xf32> to vector<2x8xf32>
    %69 = vector.shape_cast %68 : vector<2x8xf32> to vector<2x8x1xf32>
    %70 = tpu.reciprocal %69 {approx = true} : vector<2x8x1xf32> -> vector<2x8x1xf32>
    %71 = vector.broadcast %70 : vector<2x8x1xf32> to vector<2x8x8xf32>
    %72 = arith.mulf %67, %71 : vector<2x8x8xf32>
    "tpu.trace_start"() <{level = 10 : i32, message = "bqk,bkd->bqd"}> : () -> ()
    %cst_40 = arith.constant dense<0.000000e+00> : vector<2x8x16xf32>
    %73 = tpu.matmul %72, %57, %cst_40 {dimension_numbers = #tpu.dot_dimension_numbers<[2], [1], [1], [2], [0, 0, 0, 1, 1, 2], [0], [0]>} : vector<2x8x8xf32>, vector<2x8x16xf32>, vector<2x8x16xf32> -> vector<2x8x16xf32>
    "tpu.trace_stop"() : () -> ()
    %74 = tpu.concatenate %54, %73 in 2 : vector<2x8x16xf32>, vector<2x8x16xf32> -> vector<2x8x32xf32>
    "tpu.trace_start"() <{level = 10 : i32, message = "bsh,hd->bsd"}> : () -> ()
    %cst_41 = arith.constant dense<0.000000e+00> : vector<2x8x32xf32>
    %75 = tpu.matmul %74, %19, %cst_41 {dimension_numbers = #tpu.dot_dimension_numbers<[2], [0], [0, 1], [1], [0, 0, 0, 1, 1, 1], [], []>} : vector<2x8x32xf32>, vector<32x32xf32>, vector<2x8x32xf32> -> vector<2x8x32xf32>
    "tpu.trace_stop"() : () -> ()
    %76 = vector.shape_cast %21 : vector<1x32xf32> to vector<1x1x32xf32>
    %77 = vector.broadcast %76 : vector<1x1x32xf32> to vector<2x8x32xf32>
    %78 = arith.addf %75, %77 : vector<2x8x32xf32>
    %79 = arith.addf %3, %78 : vector<2x8x32xf32>
    %c0_42 = arith.constant 0 : index
    %c0_43 = arith.constant 0 : index
    %c0_44 = arith.constant 0 : index
    %80 = vector.load %arg11[%c0_42, %c0_43, %c0_44] : memref<1x1x32xf32, #tpu.memory_space<vmem>>, vector<1x1x32xf32>
    %81 = vector.shape_cast %80 : vector<1x1x32xf32> to vector<1x32xf32>
    %c0_45 = arith.constant 0 : index
    %c0_46 = arith.constant 0 : index
    %c0_47 = arith.constant 0 : index
    %82 = vector.load %arg12[%c0_45, %c0_46, %c0_47] : memref<1x1x32xf32, #tpu.memory_space<vmem>>, vector<1x1x32xf32>
    %83 = vector.shape_cast %82 : vector<1x1x32xf32> to vector<1x32xf32>
    %cst_48 = arith.constant dense<0.000000e+00> : vector<2x8xf32>
    %84 = vector.multi_reduction <add>, %79, %cst_48 [2] : vector<2x8x32xf32> to vector<2x8xf32>
    %85 = vector.shape_cast %84 : vector<2x8xf32> to vector<2x8x1xf32>
    %cst_49 = arith.constant 3.200000e+01 : f32
    %86 = vector.broadcast %cst_49 : f32 to vector<2x8x1xf32>
    %87 = arith.divf %85, %86 : vector<2x8x1xf32>
    %88 = vector.broadcast %87 : vector<2x8x1xf32> to vector<2x8x32xf32>
    %89 = arith.subf %79, %88 : vector<2x8x32xf32>
    %90 = arith.mulf %89, %89 : vector<2x8x32xf32>
    %cst_50 = arith.constant dense<0.000000e+00> : vector<2x8xf32>
    %91 = vector.multi_reduction <add>, %90, %cst_50 [2] : vector<2x8x32xf32> to vector<2x8xf32>
    %92 = vector.shape_cast %91 : vector<2x8xf32> to vector<2x8x1xf32>
    %cst_51 = arith.constant 3.200000e+01 : f32
    %93 = vector.broadcast %cst_51 : f32 to vector<2x8x1xf32>
    %94 = arith.divf %92, %93 : vector<2x8x1xf32>
    %95 = vector.broadcast %87 : vector<2x8x1xf32> to vector<2x8x32xf32>
    %96 = arith.subf %79, %95 : vector<2x8x32xf32>
    %cst_52 = arith.constant 9.99999996E-13 : f32
    %97 = vector.broadcast %cst_52 : f32 to vector<2x8x1xf32>
    %98 = arith.addf %94, %97 : vector<2x8x1xf32>
    %99 = math.rsqrt %98 : vector<2x8x1xf32>
    %100 = vector.broadcast %99 : vector<2x8x1xf32> to vector<2x8x32xf32>
    %101 = arith.mulf %96, %100 : vector<2x8x32xf32>
    %102 = vector.shape_cast %81 : vector<1x32xf32> to vector<1x1x32xf32>
    %103 = vector.broadcast %102 : vector<1x1x32xf32> to vector<2x8x32xf32>
    %104 = arith.mulf %101, %103 : vector<2x8x32xf32>
    %105 = vector.shape_cast %83 : vector<1x32xf32> to vector<1x1x32xf32>
    %106 = vector.broadcast %105 : vector<1x1x32xf32> to vector<2x8x32xf32>
    %107 = arith.addf %104, %106 : vector<2x8x32xf32>
    %c0_53 = arith.constant 0 : index
    %c0_54 = arith.constant 0 : index
    %c0_55 = arith.constant 0 : index
    %108 = vector.load %arg13[%c0_53, %c0_54, %c0_55] : memref<1x32x64xf32, #tpu.memory_space<vmem>>, vector<1x32x64xf32>
    %109 = vector.shape_cast %108 : vector<1x32x64xf32> to vector<32x64xf32>
    "tpu.trace_start"() <{level = 10 : i32, message = "bsh,hf->bsf"}> : () -> ()
    %cst_56 = arith.constant dense<0.000000e+00> : vector<2x8x64xf32>
    %110 = tpu.matmul %107, %109, %cst_56 {dimension_numbers = #tpu.dot_dimension_numbers<[2], [0], [0, 1], [1], [0, 0, 0, 1, 1, 1], [], []>} : vector<2x8x32xf32>, vector<32x64xf32>, vector<2x8x64xf32> -> vector<2x8x64xf32>
    "tpu.trace_stop"() : () -> ()
    %c0_57 = arith.constant 0 : index
    %c0_58 = arith.constant 0 : index
    %c0_59 = arith.constant 0 : index
    %111 = vector.load %arg14[%c0_57, %c0_58, %c0_59] : memref<1x1x64xf32, #tpu.memory_space<vmem>>, vector<1x1x64xf32>
    %112 = vector.shape_cast %111 : vector<1x1x64xf32> to vector<1x64xf32>
    %113 = vector.shape_cast %112 : vector<1x64xf32> to vector<1x1x64xf32>
    %114 = vector.broadcast %113 : vector<1x1x64xf32> to vector<2x8x64xf32>
    %115 = arith.addf %110, %114 : vector<2x8x64xf32>
    %116 = arith.mulf %115, %115 : vector<2x8x64xf32>
    %117 = arith.mulf %115, %116 : vector<2x8x64xf32>
    %cst_60 = arith.constant 4.471500e-02 : f32
    %118 = vector.broadcast %cst_60 : f32 to vector<2x8x64xf32>
    %119 = arith.mulf %118, %117 : vector<2x8x64xf32>
    %120 = arith.addf %115, %119 : vector<2x8x64xf32>
    %cst_61 = arith.constant 0.797884583 : f32
    %121 = vector.broadcast %cst_61 : f32 to vector<2x8x64xf32>
    %122 = arith.mulf %121, %120 : vector<2x8x64xf32>
    %123 = math.tanh %122 : vector<2x8x64xf32>
    %cst_62 = arith.constant 1.000000e+00 : f32
    %124 = vector.broadcast %cst_62 : f32 to vector<2x8x64xf32>
    %125 = arith.addf %124, %123 : vector<2x8x64xf32>
    %cst_63 = arith.constant 5.000000e-01 : f32
    %126 = vector.broadcast %cst_63 : f32 to vector<2x8x64xf32>
    %127 = arith.mulf %126, %125 : vector<2x8x64xf32>
    %128 = arith.mulf %115, %127 : vector<2x8x64xf32>
    %c0_64 = arith.constant 0 : index
    %c0_65 = arith.constant 0 : index
    %c0_66 = arith.constant 0 : index
    %129 = vector.load %arg15[%c0_64, %c0_65, %c0_66] : memref<1x64x32xf32, #tpu.memory_space<vmem>>, vector<1x64x32xf32>
    %130 = vector.shape_cast %129 : vector<1x64x32xf32> to vector<64x32xf32>
    "tpu.trace_start"() <{level = 10 : i32, message = "bsf,fh->bsh"}> : () -> ()
    %cst_67 = arith.constant dense<0.000000e+00> : vector<2x8x32xf32>
    %131 = tpu.matmul %128, %130, %cst_67 {dimension_numbers = #tpu.dot_dimension_numbers<[2], [0], [0, 1], [1], [0, 0, 0, 1, 1, 1], [], []>} : vector<2x8x64xf32>, vector<64x32xf32>, vector<2x8x32xf32> -> vector<2x8x32xf32>
    "tpu.trace_stop"() : () -> ()
    %c0_68 = arith.constant 0 : index
    %c0_69 = arith.constant 0 : index
    %c0_70 = arith.constant 0 : index
    %132 = vector.load %arg16[%c0_68, %c0_69, %c0_70] : memref<1x1x32xf32, #tpu.memory_space<vmem>>, vector<1x1x32xf32>
    %133 = vector.shape_cast %132 : vector<1x1x32xf32> to vector<1x32xf32>
    %134 = vector.shape_cast %133 : vector<1x32xf32> to vector<1x1x32xf32>
    %135 = vector.broadcast %134 : vector<1x1x32xf32> to vector<2x8x32xf32>
    %136 = arith.addf %131, %135 : vector<2x8x32xf32>
    %137 = arith.addf %107, %136 : vector<2x8x32xf32>
    %c0_71 = arith.constant 0 : index
    %c0_72 = arith.constant 0 : index
    %c0_73 = arith.constant 0 : index
    %138 = vector.load %arg17[%c0_71, %c0_72, %c0_73] : memref<1x1x32xf32, #tpu.memory_space<vmem>>, vector<1x1x32xf32>
    %139 = vector.shape_cast %138 : vector<1x1x32xf32> to vector<1x32xf32>
    %c0_74 = arith.constant 0 : index
    %c0_75 = arith.constant 0 : index
    %c0_76 = arith.constant 0 : index
    %140 = vector.load %arg18[%c0_74, %c0_75, %c0_76] : memref<1x1x32xf32, #tpu.memory_space<vmem>>, vector<1x1x32xf32>
    %141 = vector.shape_cast %140 : vector<1x1x32xf32> to vector<1x32xf32>
    %cst_77 = arith.constant dense<0.000000e+00> : vector<2x8xf32>
    %142 = vector.multi_reduction <add>, %137, %cst_77 [2] : vector<2x8x32xf32> to vector<2x8xf32>
    %143 = vector.shape_cast %142 : vector<2x8xf32> to vector<2x8x1xf32>
    %cst_78 = arith.constant 3.200000e+01 : f32
    %144 = vector.broadcast %cst_78 : f32 to vector<2x8x1xf32>
    %145 = arith.divf %143, %144 : vector<2x8x1xf32>
    %146 = vector.broadcast %145 : vector<2x8x1xf32> to vector<2x8x32xf32>
    %147 = arith.subf %137, %146 : vector<2x8x32xf32>
    %148 = arith.mulf %147, %147 : vector<2x8x32xf32>
    %cst_79 = arith.constant dense<0.000000e+00> : vector<2x8xf32>
    %149 = vector.multi_reduction <add>, %148, %cst_79 [2] : vector<2x8x32xf32> to vector<2x8xf32>
    %150 = vector.shape_cast %149 : vector<2x8xf32> to vector<2x8x1xf32>
    %cst_80 = arith.constant 3.200000e+01 : f32
    %151 = vector.broadcast %cst_80 : f32 to vector<2x8x1xf32>
    %152 = arith.divf %150, %151 : vector<2x8x1xf32>
    %153 = vector.broadcast %145 : vector<2x8x1xf32> to vector<2x8x32xf32>
    %154 = arith.subf %137, %153 : vector<2x8x32xf32>
    %cst_81 = arith.constant 9.99999996E-13 : f32
    %155 = vector.broadcast %cst_81 : f32 to vector<2x8x1xf32>
    %156 = arith.addf %152, %155 : vector<2x8x1xf32>
    %157 = math.rsqrt %156 : vector<2x8x1xf32>
    %158 = vector.broadcast %157 : vector<2x8x1xf32> to vector<2x8x32xf32>
    %159 = arith.mulf %154, %158 : vector<2x8x32xf32>
    %160 = vector.shape_cast %139 : vector<1x32xf32> to vector<1x1x32xf32>
    %161 = vector.broadcast %160 : vector<1x1x32xf32> to vector<2x8x32xf32>
    %162 = arith.mulf %159, %161 : vector<2x8x32xf32>
    %163 = vector.shape_cast %141 : vector<1x32xf32> to vector<1x1x32xf32>
    %164 = vector.broadcast %163 : vector<1x1x32xf32> to vector<2x8x32xf32>
    %165 = arith.addf %162, %164 : vector<2x8x32xf32>
    %c0_82 = arith.constant 0 : index
    %c0_83 = arith.constant 0 : index
    %c0_84 = arith.constant 0 : index
    %166 = vector.load %arg22[%c0_82, %c0_83, %c0_84] : memref<2x8x32xf32, #tpu.memory_space<vmem>>, vector<2x8x32xf32>
    tpu.vector_store %arg22[%c0_82, %c0_83, %c0_84], %165 {strides = array<i32>} : memref<2x8x32xf32, #tpu.memory_space<vmem>>, vector<2x8x32xf32>,
    %c1_i32 = arith.constant 1 : i32
    %167 = arith.cmpi eq, %arg0, %c1_i32 : i32
    %168 = arith.extui %167 : i1 to i32
    %c0_i32_85 = arith.constant 0 : i32
    %169 = arith.cmpi ne, %168, %c0_i32_85 : i32
    scf.if %169 {
      %170 = vector.extract_strided_slice %165 {offsets = [0, 0, 0], sizes = [2, 1, 32], strides = [1, 1, 1]} : vector<2x8x32xf32> to vector<2x1x32xf32>
      %171 = vector.shape_cast %170 : vector<2x1x32xf32> to vector<2x32xf32>
      %c0_86 = arith.constant 0 : index
      %c0_87 = arith.constant 0 : index
      %172 = vector.load %arg19[%c0_86, %c0_87] : memref<1x32xf32, #tpu.memory_space<vmem>>, vector<1x32xf32>
      %173 = vector.broadcast %172 : vector<1x32xf32> to vector<2x32xf32>
      %174 = arith.mulf %171, %173 : vector<2x32xf32>
      %cst_88 = arith.constant dense<0.000000e+00> : vector<2xf32>
      %175 = vector.multi_reduction <add>, %174, %cst_88 [1] : vector<2x32xf32> to vector<2xf32>
      %176 = vector.shape_cast %175 : vector<2xf32> to vector<2x1xf32>
      %c0_89 = arith.constant 0 : index
      %c0_90 = arith.constant 0 : index
      %177 = vector.load %arg20[%c0_89, %c0_90] : memref<1x1xf32, #tpu.memory_space<vmem>>, vector<1x1xf32>
      %178 = vector.broadcast %177 : vector<1x1xf32> to vector<2x1xf32>
      %179 = arith.addf %176, %178 : vector<2x1xf32>
      %cst_91 = arith.constant 0.000000e+00 : f32
      %180 = vector.broadcast %cst_91 : f32 to vector<2x1xf32>
      %181 = arith.subf %180, %179 : vector<2x1xf32>
      %182 = math.exp %181 : vector<2x1xf32>
      %cst_92 = arith.constant 1.000000e+00 : f32
      %183 = vector.broadcast %cst_92 : f32 to vector<2x1xf32>
      %184 = arith.addf %183, %182 : vector<2x1xf32>
      %cst_93 = arith.constant 1.000000e+00 : f32
      %185 = vector.broadcast %cst_93 : f32 to vector<2x1xf32>
      %186 = arith.divf %185, %184 : vector<2x1xf32>
      %187 = vector.shape_cast %186 : vector<2x1xf32> to vector<2x1xf32>
      %188 = vector.broadcast %187 : vector<2x1xf32> to vector<2x128xf32>
      %c0_94 = arith.constant 0 : index
      %c0_95 = arith.constant 0 : index
      %189 = vector.load %arg21[%c0_94, %c0_95] : memref<2x128xf32, #tpu.memory_space<vmem>>, vector<2x128xf32>
      tpu.vector_store %arg21[%c0_94, %c0_95], %188 {strides = array<i32>} : memref<2x128xf32, #tpu.memory_space<vmem>>, vector<2x128xf32>,
    } else {
    }
    return
  }
  func.func @transform_0(%arg0: i32) -> (i32, i32, i32) {
    %c0_i32 = arith.constant 0 : i32
    %c0_i32_0 = arith.constant 0 : i32
    %c0_i32_1 = arith.constant 0 : i32
    %c0_i32_2 = arith.constant 0 : i32
    return %c0_i32, %c0_i32_0, %c0_i32_1 : i32, i32, i32
  }
  func.func @transform_1(%arg0: i32) -> (i32, i32) {
    %c0_i32 = arith.constant 0 : i32
    %c0_i32_0 = arith.constant 0 : i32
    %c0_i32_1 = arith.constant 0 : i32
    return %c0_i32, %c0_i32_0 : i32, i32
  }
  func.func @transform_2(%arg0: i32) -> (i32, i32, i32) {
    %c0_i32 = arith.constant 0 : i32
    %c0_i32_0 = arith.constant 0 : i32
    %c0_i32_1 = arith.constant 0 : i32
    return %arg0, %c0_i32, %c0_i32_0 : i32, i32, i32
  }
  func.func @transform_3(%arg0: i32) -> (i32, i32, i32) {
    %c0_i32 = arith.constant 0 : i32
    %c0_i32_0 = arith.constant 0 : i32
    %c0_i32_1 = arith.constant 0 : i32
    return %arg0, %c0_i32, %c0_i32_0 : i32, i32, i32
  }
  func.func @transform_4(%arg0: i32) -> (i32, i32, i32) {
    %c0_i32 = arith.constant 0 : i32
    %c0_i32_0 = arith.constant 0 : i32
    %c0_i32_1 = arith.constant 0 : i32
    return %arg0, %c0_i32, %c0_i32_0 : i32, i32, i32
  }
  func.func @transform_5(%arg0: i32) -> (i32, i32, i32) {
    %c0_i32 = arith.constant 0 : i32
    %c0_i32_0 = arith.constant 0 : i32
    %c0_i32_1 = arith.constant 0 : i32
    return %arg0, %c0_i32, %c0_i32_0 : i32, i32, i32
  }
  func.func @transform_6(%arg0: i32) -> (i32, i32, i32) {
    %c0_i32 = arith.constant 0 : i32
    %c0_i32_0 = arith.constant 0 : i32
    %c0_i32_1 = arith.constant 0 : i32
    return %arg0, %c0_i32, %c0_i32_0 : i32, i32, i32
  }
  func.func @transform_7(%arg0: i32) -> (i32, i32, i32) {
    %c0_i32 = arith.constant 0 : i32
    %c0_i32_0 = arith.constant 0 : i32
    %c0_i32_1 = arith.constant 0 : i32
    return %arg0, %c0_i32, %c0_i32_0 : i32, i32, i32
  }
  func.func @transform_8(%arg0: i32) -> (i32, i32, i32) {
    %c0_i32 = arith.constant 0 : i32
    %c0_i32_0 = arith.constant 0 : i32
    %c0_i32_1 = arith.constant 0 : i32
    return %arg0, %c0_i32, %c0_i32_0 : i32, i32, i32
  }
  func.func @transform_9(%arg0: i32) -> (i32, i32, i32) {
    %c0_i32 = arith.constant 0 : i32
    %c0_i32_0 = arith.constant 0 : i32
    %c0_i32_1 = arith.constant 0 : i32
    return %arg0, %c0_i32, %c0_i32_0 : i32, i32, i32
  }
  func.func @transform_10(%arg0: i32) -> (i32, i32, i32) {
    %c0_i32 = arith.constant 0 : i32
    %c0_i32_0 = arith.constant 0 : i32
    %c0_i32_1 = arith.constant 0 : i32
    return %arg0, %c0_i32, %c0_i32_0 : i32, i32, i32
  }
  func.func @transform_11(%arg0: i32) -> (i32, i32, i32) {
    %c0_i32 = arith.constant 0 : i32
    %c0_i32_0 = arith.constant 0 : i32
    %c0_i32_1 = arith.constant 0 : i32
    return %arg0, %c0_i32, %c0_i32_0 : i32, i32, i32
  }
  func.func @transform_12(%arg0: i32) -> (i32, i32, i32) {
    %c0_i32 = arith.constant 0 : i32
    %c0_i32_0 = arith.constant 0 : i32
    %c0_i32_1 = arith.constant 0 : i32
    return %arg0, %c0_i32, %c0_i32_0 : i32, i32, i32
  }
  func.func @transform_13(%arg0: i32) -> (i32, i32, i32) {
    %c0_i32 = arith.constant 0 : i32
    %c0_i32_0 = arith.constant 0 : i32
    %c0_i32_1 = arith.constant 0 : i32
    return %arg0, %c0_i32, %c0_i32_0 : i32, i32, i32
  }
  func.func @transform_14(%arg0: i32) -> (i32, i32, i32) {
    %c0_i32 = arith.constant 0 : i32
    %c0_i32_0 = arith.constant 0 : i32
    %c0_i32_1 = arith.constant 0 : i32
    return %arg0, %c0_i32, %c0_i32_0 : i32, i32, i32
  }
  func.func @transform_15(%arg0: i32) -> (i32, i32, i32) {
    %c0_i32 = arith.constant 0 : i32
    %c0_i32_0 = arith.constant 0 : i32
    %c0_i32_1 = arith.constant 0 : i32
    return %arg0, %c0_i32, %c0_i32_0 : i32, i32, i32
  }
  func.func @transform_16(%arg0: i32) -> (i32, i32, i32) {
    %c0_i32 = arith.constant 0 : i32
    %c0_i32_0 = arith.constant 0 : i32
    %c0_i32_1 = arith.constant 0 : i32
    return %arg0, %c0_i32, %c0_i32_0 : i32, i32, i32
  }
  func.func @transform_17(%arg0: i32) -> (i32, i32, i32) {
    %c0_i32 = arith.constant 0 : i32
    %c0_i32_0 = arith.constant 0 : i32
    %c0_i32_1 = arith.constant 0 : i32
    return %arg0, %c0_i32, %c0_i32_0 : i32, i32, i32
  }
  func.func @transform_18(%arg0: i32) -> (i32, i32) {
    %c0_i32 = arith.constant 0 : i32
    %c0_i32_0 = arith.constant 0 : i32
    %c0_i32_1 = arith.constant 0 : i32
    return %c0_i32, %c0_i32_0 : i32, i32
  }
  func.func @transform_19(%arg0: i32) -> (i32, i32) {
    %c0_i32 = arith.constant 0 : i32
    %c0_i32_0 = arith.constant 0 : i32
    %c0_i32_1 = arith.constant 0 : i32
    return %c0_i32, %c0_i32_0 : i32, i32
  }
  func.func @transform_20(%arg0: i32) -> (i32, i32) {
    %c0_i32 = arith.constant 0 : i32
    %c0_i32_0 = arith.constant 0 : i32
    %c0_i32_1 = arith.constant 0 : i32
    return %c0_i32, %c0_i32_0 : i32, i32
  }
}

</mosaic_0001>

<llo_original>
// kernel: reranker_regressor_forward.1
$region0: #{reranker_regressor_forward.1}
  #allocation0 [shape = 'u32[]', space=smem, size = 0x4, offset = 0x4, fixed_abs, tag = 'smem constant byte address 0x4 - core index']
  #allocation1 [shape = 'u32[144,128]{1,0:T(1,128)}', space=vmem, size = 0x12000, scoped, tag = 'internal scratch']
  #allocation2 [shape = 'f32[2,8,32]{2,1,0:T(8,128)}', space=vmem, size = 0x2000, scoped, tag = 'scratch operand']
  #allocation3 [shape = 'f32[1,1]{1,0:T(1,128)S(1)}', space=vmem, size = 0x200, scoped, tag = 'scoped memory for reranker_regressor_forward.1']
  %s0 = inlined_call_operand.vmem [shape: f32[2,8,32], index: 0, kind: input, shape index: {}]
  %s1 = inlined_call_operand.vmem [shape: f32[2,8], index: 1, kind: input, shape index: {}]
  %s2 = inlined_call_operand.vmem [shape: f32[2,32,32], index: 2, kind: input, shape index: {}]
  %s3 = inlined_call_operand.vmem [shape: f32[2,1,32], index: 3, kind: input, shape index: {}]
  %s4 = inlined_call_operand.vmem [shape: f32[2,32,32], index: 4, kind: input, shape index: {}]
  %s5 = inlined_call_operand.vmem [shape: f32[2,1,32], index: 5, kind: input, shape index: {}]
  %s6 = inlined_call_operand.vmem [shape: f32[2,32,32], index: 6, kind: input, shape index: {}]
  %s7 = inlined_call_operand.vmem [shape: f32[2,1,32], index: 7, kind: input, shape index: {}]
  %s8 = inlined_call_operand.vmem [shape: f32[2,32,32], index: 8, kind: input, shape index: {}]
  %s9 = inlined_call_operand.vmem [shape: f32[2,1,32], index: 9, kind: input, shape index: {}]
  %s10 = inlined_call_operand.vmem [shape: f32[2,1,32], index: 10, kind: input, shape index: {}]
  %s11 = inlined_call_operand.vmem [shape: f32[2,1,32], index: 11, kind: input, shape index: {}]
  %s12 = inlined_call_operand.vmem [shape: f32[2,32,64], index: 12, kind: input, shape index: {}]
  %s13 = inlined_call_operand.vmem [shape: f32[2,1,64], index: 13, kind: input, shape index: {}]
  %s14 = inlined_call_operand.vmem [shape: f32[2,64,32], index: 14, kind: input, shape index: {}]
  %s15 = inlined_call_operand.vmem [shape: f32[2,1,32], index: 15, kind: input, shape index: {}]
  %s16 = inlined_call_operand.vmem [shape: f32[2,1,32], index: 16, kind: input, shape index: {}]
  %s17 = inlined_call_operand.vmem [shape: f32[2,1,32], index: 17, kind: input, shape index: {}]
  %s18 = inlined_call_operand.vmem [shape: f32[1,32], index: 18, kind: input, shape index: {}]
  %s19 = inlined_call_operand.<no memory space> [shape: f32[1,1], index: 19, kind: input, shape index: {}]
  %s20 = inlined_call_operand.vmem [shape: f32[2,128], index: 20, kind: output, shape index: {}]
  %s21 = sld [smem:[#allocation0]]
  $region121: #{reranker_regressor_forward.1} parent=0
    _
  %s23 = ssub.s32 1, %s21
  %s24 = scalar_select 0, %s23, %s21
  %v25 = vstv %s19
  %26 = vst [vmem:[#allocation3] sm:$0x1] %v25
  loop: start=0, step=1, limit=4
  $region2: #{reranker_regressor_forward.1} parent=0 // loop_pre_header
    _
  $region3: #{reranker_regressor_forward.1} parent=0 // loop_header
    %s28 = sphi 0, %s32
    %p29 = scmp.ge.s32.totalorder %s28, 4
    %s36 = sphi 0, %s36
    %s38 = sphi 0, %s36
    %s39 = sphi 0, %s38
    %s53 = sphi 0, %s39
    %s57 = sphi 0, %s57
    %s59 = sphi 0, %s57
    %s60 = sphi 0, %s59
    %s74 = sphi 0, %s60
    %s80 = sphi 0, %s82
    %s83 = sphi 0, %s80
    %s84 = sphi 0, %s83
    %s100 = sphi 0, %s84
    %s106 = sphi 0, %s108
    %s109 = sphi 0, %s106
    %s110 = sphi 0, %s109
    %s126 = sphi 0, %s110
    %s132 = sphi 0, %s134
    %s135 = sphi 0, %s132
    %s136 = sphi 0, %s135
    %s152 = sphi 0, %s136
    %s158 = sphi 0, %s160
    %s161 = sphi 0, %s158
    %s162 = sphi 0, %s161
    %s178 = sphi 0, %s162
    %s184 = sphi 0, %s186
    %s187 = sphi 0, %s184
    %s188 = sphi 0, %s187
    %s204 = sphi 0, %s188
    %s210 = sphi 0, %s212
    %s213 = sphi 0, %s210
    %s214 = sphi 0, %s213
    %s230 = sphi 0, %s214
    %s236 = sphi 0, %s238
    %s239 = sphi 0, %s236
    %s240 = sphi 0, %s239
    %s256 = sphi 0, %s240
    %s262 = sphi 0, %s264
    %s265 = sphi 0, %s262
    %s266 = sphi 0, %s265
    %s282 = sphi 0, %s266
    %s288 = sphi 0, %s290
    %s291 = sphi 0, %s288
    %s292 = sphi 0, %s291
    %s308 = sphi 0, %s292
    %s314 = sphi 0, %s316
    %s317 = sphi 0, %s314
    %s318 = sphi 0, %s317
    %s334 = sphi 0, %s318
    %s340 = sphi 0, %s342
    %s343 = sphi 0, %s340
    %s344 = sphi 0, %s343
    %s360 = sphi 0, %s344
    %s366 = sphi 0, %s368
    %s369 = sphi 0, %s366
    %s370 = sphi 0, %s369
    %s386 = sphi 0, %s370
    %s392 = sphi 0, %s394
    %s395 = sphi 0, %s392
    %s396 = sphi 0, %s395
    %s412 = sphi 0, %s396
    %s418 = sphi 0, %s420
    %s421 = sphi 0, %s418
    %s422 = sphi 0, %s421
    %s438 = sphi 0, %s422
    %s444 = sphi 0, %s446
    %s447 = sphi 0, %s444
    %s448 = sphi 0, %s447
    %s464 = sphi 0, %s448
    %s470 = sphi 0, %s472
    %s473 = sphi 0, %s470
    %s474 = sphi 0, %s473
    %s490 = sphi 0, %s474
    %s494 = sphi 0, %s494
    %s496 = sphi 0, %s494
    %s497 = sphi 0, %s496
    %s511 = sphi 0, %s497
    %s515 = sphi 0, %s515
    %s517 = sphi 0, %s515
    %s518 = sphi 0, %s517
    %s532 = sphi 0, %s518
    %s536 = sphi 0, %s536
    %s538 = sphi 0, %s536
    %s539 = sphi 0, %s538
    %s553 = sphi 0, %s539
  $region4: #{reranker_regressor_forward.1} parent=0 // loop_header_branch
    %31 = sbr.rel (%p29) target = $region8
  $region5: #{reranker_regressor_forward.1} parent=0 // loop_body
    %s33 = ssub.s32 %s28, 1
    %s34 = ssub.s32 %s28, 2
    %s35 = sadd.s32 %s28, 1
    %s37 = sadd.s32 %s36, 1
    %p40 = scmp.eq.s32.totalorder %s28, 1
    %p41 = scmp.ne.s32.totalorder %s36, %s38
    %p42 = scmp.eq.s32.totalorder %s28, 0
    %p43 = por %p41, %p42
    %p44 = scmp.ne.s32.totalorder %s36, %s38
    %p45 = scmp.eq.s32.totalorder %s33, 1
    %p46 = por %p44, %p45
    %p47 = scmp.ne.s32.totalorder %s38, %s39
    %p48 = scmp.eq.s32.totalorder %s33, 0
    %p49 = por %p47, %p48
    %p50 = scmp.ne.s32.totalorder %s38, %s39
    %p51 = scmp.eq.s32.totalorder %s34, 1
    %p52 = por %p50, %p51
    %p54 = scmp.ne.s32.totalorder %s39, %s53
    %p55 = scmp.eq.s32.totalorder %s34, 0
    %p56 = por %p54, %p55
    %s58 = sadd.s32 %s57, 1
    %p61 = scmp.eq.s32.totalorder %s28, 1
    %p62 = scmp.ne.s32.totalorder %s57, %s59
    %p63 = scmp.eq.s32.totalorder %s28, 0
    %p64 = por %p62, %p63
    %p65 = scmp.ne.s32.totalorder %s57, %s59
    %p66 = scmp.eq.s32.totalorder %s33, 1
    %p67 = por %p65, %p66
    %p68 = scmp.ne.s32.totalorder %s59, %s60
    %p69 = scmp.eq.s32.totalorder %s33, 0
    %p70 = por %p68, %p69
    %p71 = scmp.ne.s32.totalorder %s59, %s60
    %p72 = scmp.eq.s32.totalorder %s34, 1
    %p73 = por %p71, %p72
    %p75 = scmp.ne.s32.totalorder %s60, %s74
    %p76 = scmp.eq.s32.totalorder %s34, 0
    %p77 = por %p75, %p76
    %s78 = ssub.s32 %s28, %s35
    %p79 = scmp.eq.s32.totalorder %s78, 0
    %s81 = sadd.s32 %s80, 1
    %s82 = scalar_select %p79, %s80, %s81
    %p85 = pneg %p79
    %p86 = scmp.eq.s32.totalorder %s28, 1
    %p87 = por %p85, %p86
    %p88 = scmp.ne.s32.totalorder %s80, %s83
    %p89 = scmp.eq.s32.totalorder %s28, 0
    %p90 = por %p88, %p89
    %p91 = scmp.ne.s32.totalorder %s80, %s83
    %p92 = scmp.eq.s32.totalorder %s33, 1
    %p93 = por %p91, %p92
    %p94 = scmp.ne.s32.totalorder %s83, %s84
    %p95 = scmp.eq.s32.totalorder %s33, 0
    %p96 = por %p94, %p95
    %p97 = scmp.ne.s32.totalorder %s83, %s84
    %p98 = scmp.eq.s32.totalorder %s34, 1
    %p99 = por %p97, %p98
    %p101 = scmp.ne.s32.totalorder %s84, %s100
    %p102 = scmp.eq.s32.totalorder %s34, 0
    %p103 = por %p101, %p102
    %s104 = ssub.s32 %s28, %s35
    %p105 = scmp.eq.s32.totalorder %s104, 0
    %s107 = sadd.s32 %s106, 1
    %s108 = scalar_select %p105, %s106, %s107
    %p111 = pneg %p105
    %p112 = scmp.eq.s32.totalorder %s28, 1
    %p113 = por %p111, %p112
    %p114 = scmp.ne.s32.totalorder %s106, %s109
    %p115 = scmp.eq.s32.totalorder %s28, 0
    %p116 = por %p114, %p115
    %p117 = scmp.ne.s32.totalorder %s106, %s109
    %p118 = scmp.eq.s32.totalorder %s33, 1
    %p119 = por %p117, %p118
    %p120 = scmp.ne.s32.totalorder %s109, %s110
    %p121 = scmp.eq.s32.totalorder %s33, 0
    %p122 = por %p120, %p121
    %p123 = scmp.ne.s32.totalorder %s109, %s110
    %p124 = scmp.eq.s32.totalorder %s34, 1
    %p125 = por %p123, %p124
    %p127 = scmp.ne.s32.totalorder %s110, %s126
    %p128 = scmp.eq.s32.totalorder %s34, 0
    %p129 = por %p127, %p128
    %s130 = ssub.s32 %s28, %s35
    %p131 = scmp.eq.s32.totalorder %s130, 0
    %s133 = sadd.s32 %s132, 1
    %s134 = scalar_select %p131, %s132, %s133
    %p137 = pneg %p131
    %p138 = scmp.eq.s32.totalorder %s28, 1
    %p139 = por %p137, %p138
    %p140 = scmp.ne.s32.totalorder %s132, %s135
    %p141 = scmp.eq.s32.totalorder %s28, 0
    %p142 = por %p140, %p141
    %p143 = scmp.ne.s32.totalorder %s132, %s135
    %p144 = scmp.eq.s32.totalorder %s33, 1
    %p145 = por %p143, %p144
    %p146 = scmp.ne.s32.totalorder %s135, %s136
    %p147 = scmp.eq.s32.totalorder %s33, 0
    %p148 = por %p146, %p147
    %p149 = scmp.ne.s32.totalorder %s135, %s136
    %p150 = scmp.eq.s32.totalorder %s34, 1
    %p151 = por %p149, %p150
    %p153 = scmp.ne.s32.totalorder %s136, %s152
    %p154 = scmp.eq.s32.totalorder %s34, 0
    %p155 = por %p153, %p154
    %s156 = ssub.s32 %s28, %s35
    %p157 = scmp.eq.s32.totalorder %s156, 0
    %s159 = sadd.s32 %s158, 1
    %s160 = scalar_select %p157, %s158, %s159
    %p163 = pneg %p157
    %p164 = scmp.eq.s32.totalorder %s28, 1
    %p165 = por %p163, %p164
    %p166 = scmp.ne.s32.totalorder %s158, %s161
    %p167 = scmp.eq.s32.totalorder %s28, 0
    %p168 = por %p166, %p167
    %p169 = scmp.ne.s32.totalorder %s158, %s161
    %p170 = scmp.eq.s32.totalorder %s33, 1
    %p171 = por %p169, %p170
    %p172 = scmp.ne.s32.totalorder %s161, %s162
    %p173 = scmp.eq.s32.totalorder %s33, 0
    %p174 = por %p172, %p173
    %p175 = scmp.ne.s32.totalorder %s161, %s162
    %p176 = scmp.eq.s32.totalorder %s34, 1
    %p177 = por %p175, %p176
    %p179 = scmp.ne.s32.totalorder %s162, %s178
    %p180 = scmp.eq.s32.totalorder %s34, 0
    %p181 = por %p179, %p180
    %s182 = ssub.s32 %s28, %s35
    %p183 = scmp.eq.s32.totalorder %s182, 0
    %s185 = sadd.s32 %s184, 1
    %s186 = scalar_select %p183, %s184, %s185
    %p189 = pneg %p183
    %p190 = scmp.eq.s32.totalorder %s28, 1
    %p191 = por %p189, %p190
    %p192 = scmp.ne.s32.totalorder %s184, %s187
    %p193 = scmp.eq.s32.totalorder %s28, 0
    %p194 = por %p192, %p193
    %p195 = scmp.ne.s32.totalorder %s184, %s187
    %p196 = scmp.eq.s32.totalorder %s33, 1
    %p197 = por %p195, %p196
    %p198 = scmp.ne.s32.totalorder %s187, %s188
    %p199 = scmp.eq.s32.totalorder %s33, 0
    %p200 = por %p198, %p199
    %p201 = scmp.ne.s32.totalorder %s187, %s188
    %p202 = scmp.eq.s32.totalorder %s34, 1
    %p203 = por %p201, %p202
    %p205 = scmp.ne.s32.totalorder %s188, %s204
    %p206 = scmp.eq.s32.totalorder %s34, 0
    %p207 = por %p205, %p206
    %s208 = ssub.s32 %s28, %s35
    %p209 = scmp.eq.s32.totalorder %s208, 0
    %s211 = sadd.s32 %s210, 1
    %s212 = scalar_select %p209, %s210, %s211
    %p215 = pneg %p209
    %p216 = scmp.eq.s32.totalorder %s28, 1
    %p217 = por %p215, %p216
    %p218 = scmp.ne.s32.totalorder %s210, %s213
    %p219 = scmp.eq.s32.totalorder %s28, 0
    %p220 = por %p218, %p219
    %p221 = scmp.ne.s32.totalorder %s210, %s213
    %p222 = scmp.eq.s32.totalorder %s33, 1
    %p223 = por %p221, %p222
    %p224 = scmp.ne.s32.totalorder %s213, %s214
    %p225 = scmp.eq.s32.totalorder %s33, 0
    %p226 = por %p224, %p225
    %p227 = scmp.ne.s32.totalorder %s213, %s214
    %p228 = scmp.eq.s32.totalorder %s34, 1
    %p229 = por %p227, %p228
    %p231 = scmp.ne.s32.totalorder %s214, %s230
    %p232 = scmp.eq.s32.totalorder %s34, 0
    %p233 = por %p231, %p232
    %s234 = ssub.s32 %s28, %s35
    %p235 = scmp.eq.s32.totalorder %s234, 0
    %s237 = sadd.s32 %s236, 1
    %s238 = scalar_select %p235, %s236, %s237
    %p241 = pneg %p235
    %p242 = scmp.eq.s32.totalorder %s28, 1
    %p243 = por %p241, %p242
    %p244 = scmp.ne.s32.totalorder %s236, %s239
    %p245 = scmp.eq.s32.totalorder %s28, 0
    %p246 = por %p244, %p245
    %p247 = scmp.ne.s32.totalorder %s236, %s239
    %p248 = scmp.eq.s32.totalorder %s33, 1
    %p249 = por %p247, %p248
    %p250 = scmp.ne.s32.totalorder %s239, %s240
    %p251 = scmp.eq.s32.totalorder %s33, 0
    %p252 = por %p250, %p251
    %p253 = scmp.ne.s32.totalorder %s239, %s240
    %p254 = scmp.eq.s32.totalorder %s34, 1
    %p255 = por %p253, %p254
    %p257 = scmp.ne.s32.totalorder %s240, %s256
    %p258 = scmp.eq.s32.totalorder %s34, 0
    %p259 = por %p257, %p258
    %s260 = ssub.s32 %s28, %s35
    %p261 = scmp.eq.s32.totalorder %s260, 0
    %s263 = sadd.s32 %s262, 1
    %s264 = scalar_select %p261, %s262, %s263
    %p267 = pneg %p261
    %p268 = scmp.eq.s32.totalorder %s28, 1
    %p269 = por %p267, %p268
    %p270 = scmp.ne.s32.totalorder %s262, %s265
    %p271 = scmp.eq.s32.totalorder %s28, 0
    %p272 = por %p270, %p271
    %p273 = scmp.ne.s32.totalorder %s262, %s265
    %p274 = scmp.eq.s32.totalorder %s33, 1
    %p275 = por %p273, %p274
    %p276 = scmp.ne.s32.totalorder %s265, %s266
    %p277 = scmp.eq.s32.totalorder %s33, 0
    %p278 = por %p276, %p277
    %p279 = scmp.ne.s32.totalorder %s265, %s266
    %p280 = scmp.eq.s32.totalorder %s34, 1
    %p281 = por %p279, %p280
    %p283 = scmp.ne.s32.totalorder %s266, %s282
    %p284 = scmp.eq.s32.totalorder %s34, 0
    %p285 = por %p283, %p284
    %s286 = ssub.s32 %s28, %s35
    %p287 = scmp.eq.s32.totalorder %s286, 0
    %s289 = sadd.s32 %s288, 1
    %s290 = scalar_select %p287, %s288, %s289
    %p293 = pneg %p287
    %p294 = scmp.eq.s32.totalorder %s28, 1
    %p295 = por %p293, %p294
    %p296 = scmp.ne.s32.totalorder %s288, %s291
    %p297 = scmp.eq.s32.totalorder %s28, 0
    %p298 = por %p296, %p297
    %p299 = scmp.ne.s32.totalorder %s288, %s291
    %p300 = scmp.eq.s32.totalorder %s33, 1
    %p301 = por %p299, %p300
    %p302 = scmp.ne.s32.totalorder %s291, %s292
    %p303 = scmp.eq.s32.totalorder %s33, 0
    %p304 = por %p302, %p303
    %p305 = scmp.ne.s32.totalorder %s291, %s292
    %p306 = scmp.eq.s32.totalorder %s34, 1
    %p307 = por %p305, %p306
    %p309 = scmp.ne.s32.totalorder %s292, %s308
    %p310 = scmp.eq.s32.totalorder %s34, 0
    %p311 = por %p309, %p310
    %s312 = ssub.s32 %s28, %s35
    %p313 = scmp.eq.s32.totalorder %s312, 0
    %s315 = sadd.s32 %s314, 1
    %s316 = scalar_select %p313, %s314, %s315
    %p319 = pneg %p313
    %p320 = scmp.eq.s32.totalorder %s28, 1
    %p321 = por %p319, %p320
    %p322 = scmp.ne.s32.totalorder %s314, %s317
    %p323 = scmp.eq.s32.totalorder %s28, 0
    %p324 = por %p322, %p323
    %p325 = scmp.ne.s32.totalorder %s314, %s317
    %p326 = scmp.eq.s32.totalorder %s33, 1
    %p327 = por %p325, %p326
    %p328 = scmp.ne.s32.totalorder %s317, %s318
    %p329 = scmp.eq.s32.totalorder %s33, 0
    %p330 = por %p328, %p329
    %p331 = scmp.ne.s32.totalorder %s317, %s318
    %p332 = scmp.eq.s32.totalorder %s34, 1
    %p333 = por %p331, %p332
    %p335 = scmp.ne.s32.totalorder %s318, %s334
    %p336 = scmp.eq.s32.totalorder %s34, 0
    %p337 = por %p335, %p336
    %s338 = ssub.s32 %s28, %s35
    %p339 = scmp.eq.s32.totalorder %s338, 0
    %s341 = sadd.s32 %s340, 1
    %s342 = scalar_select %p339, %s340, %s341
    %p345 = pneg %p339
    %p346 = scmp.eq.s32.totalorder %s28, 1
    %p347 = por %p345, %p346
    %p348 = scmp.ne.s32.totalorder %s340, %s343
    %p349 = scmp.eq.s32.totalorder %s28, 0
    %p350 = por %p348, %p349
    %p351 = scmp.ne.s32.totalorder %s340, %s343
    %p352 = scmp.eq.s32.totalorder %s33, 1
    %p353 = por %p351, %p352
    %p354 = scmp.ne.s32.totalorder %s343, %s344
    %p355 = scmp.eq.s32.totalorder %s33, 0
    %p356 = por %p354, %p355
    %p357 = scmp.ne.s32.totalorder %s343, %s344
    %p358 = scmp.eq.s32.totalorder %s34, 1
    %p359 = por %p357, %p358
    %p361 = scmp.ne.s32.totalorder %s344, %s360
    %p362 = scmp.eq.s32.totalorder %s34, 0
    %p363 = por %p361, %p362
    %s364 = ssub.s32 %s28, %s35
    %p365 = scmp.eq.s32.totalorder %s364, 0
    %s367 = sadd.s32 %s366, 1
    %s368 = scalar_select %p365, %s366, %s367
    %p371 = pneg %p365
    %p372 = scmp.eq.s32.totalorder %s28, 1
    %p373 = por %p371, %p372
    %p374 = scmp.ne.s32.totalorder %s366, %s369
    %p375 = scmp.eq.s32.totalorder %s28, 0
    %p376 = por %p374, %p375
    %p377 = scmp.ne.s32.totalorder %s366, %s369
    %p378 = scmp.eq.s32.totalorder %s33, 1
    %p379 = por %p377, %p378
    %p380 = scmp.ne.s32.totalorder %s369, %s370
    %p381 = scmp.eq.s32.totalorder %s33, 0
    %p382 = por %p380, %p381
    %p383 = scmp.ne.s32.totalorder %s369, %s370
    %p384 = scmp.eq.s32.totalorder %s34, 1
    %p385 = por %p383, %p384
    %p387 = scmp.ne.s32.totalorder %s370, %s386
    %p388 = scmp.eq.s32.totalorder %s34, 0
    %p389 = por %p387, %p388
    %s390 = ssub.s32 %s28, %s35
    %p391 = scmp.eq.s32.totalorder %s390, 0
    %s393 = sadd.s32 %s392, 1
    %s394 = scalar_select %p391, %s392, %s393
    %p397 = pneg %p391
    %p398 = scmp.eq.s32.totalorder %s28, 1
    %p399 = por %p397, %p398
    %p400 = scmp.ne.s32.totalorder %s392, %s395
    %p401 = scmp.eq.s32.totalorder %s28, 0
    %p402 = por %p400, %p401
    %p403 = scmp.ne.s32.totalorder %s392, %s395
    %p404 = scmp.eq.s32.totalorder %s33, 1
    %p405 = por %p403, %p404
    %p406 = scmp.ne.s32.totalorder %s395, %s396
    %p407 = scmp.eq.s32.totalorder %s33, 0
    %p408 = por %p406, %p407
    %p409 = scmp.ne.s32.totalorder %s395, %s396
    %p410 = scmp.eq.s32.totalorder %s34, 1
    %p411 = por %p409, %p410
    %p413 = scmp.ne.s32.totalorder %s396, %s412
    %p414 = scmp.eq.s32.totalorder %s34, 0
    %p415 = por %p413, %p414
    %s416 = ssub.s32 %s28, %s35
    %p417 = scmp.eq.s32.totalorder %s416, 0
    %s419 = sadd.s32 %s418, 1
    %s420 = scalar_select %p417, %s418, %s419
    %p423 = pneg %p417
    %p424 = scmp.eq.s32.totalorder %s28, 1
    %p425 = por %p423, %p424
    %p426 = scmp.ne.s32.totalorder %s418, %s421
    %p427 = scmp.eq.s32.totalorder %s28, 0
    %p428 = por %p426, %p427
    %p429 = scmp.ne.s32.totalorder %s418, %s421
    %p430 = scmp.eq.s32.totalorder %s33, 1
    %p431 = por %p429, %p430
    %p432 = scmp.ne.s32.totalorder %s421, %s422
    %p433 = scmp.eq.s32.totalorder %s33, 0
    %p434 = por %p432, %p433
    %p435 = scmp.ne.s32.totalorder %s421, %s422
    %p436 = scmp.eq.s32.totalorder %s34, 1
    %p437 = por %p435, %p436
    %p439 = scmp.ne.s32.totalorder %s422, %s438
    %p440 = scmp.eq.s32.totalorder %s34, 0
    %p441 = por %p439, %p440
    %s442 = ssub.s32 %s28, %s35
    %p443 = scmp.eq.s32.totalorder %s442, 0
    %s445 = sadd.s32 %s444, 1
    %s446 = scalar_select %p443, %s444, %s445
    %p449 = pneg %p443
    %p450 = scmp.eq.s32.totalorder %s28, 1
    %p451 = por %p449, %p450
    %p452 = scmp.ne.s32.totalorder %s444, %s447
    %p453 = scmp.eq.s32.totalorder %s28, 0
    %p454 = por %p452, %p453
    %p455 = scmp.ne.s32.totalorder %s444, %s447
    %p456 = scmp.eq.s32.totalorder %s33, 1
    %p457 = por %p455, %p456
    %p458 = scmp.ne.s32.totalorder %s447, %s448
    %p459 = scmp.eq.s32.totalorder %s33, 0
    %p460 = por %p458, %p459
    %p461 = scmp.ne.s32.totalorder %s447, %s448
    %p462 = scmp.eq.s32.totalorder %s34, 1
    %p463 = por %p461, %p462
    %p465 = scmp.ne.s32.totalorder %s448, %s464
    %p466 = scmp.eq.s32.totalorder %s34, 0
    %p467 = por %p465, %p466
    %s468 = ssub.s32 %s28, %s35
    %p469 = scmp.eq.s32.totalorder %s468, 0
    %s471 = sadd.s32 %s470, 1
    %s472 = scalar_select %p469, %s470, %s471
    %p475 = pneg %p469
    %p476 = scmp.eq.s32.totalorder %s28, 1
    %p477 = por %p475, %p476
    %p478 = scmp.ne.s32.totalorder %s470, %s473
    %p479 = scmp.eq.s32.totalorder %s28, 0
    %p480 = por %p478, %p479
    %p481 = scmp.ne.s32.totalorder %s470, %s473
    %p482 = scmp.eq.s32.totalorder %s33, 1
    %p483 = por %p481, %p482
    %p484 = scmp.ne.s32.totalorder %s473, %s474
    %p485 = scmp.eq.s32.totalorder %s33, 0
    %p486 = por %p484, %p485
    %p487 = scmp.ne.s32.totalorder %s473, %s474
    %p488 = scmp.eq.s32.totalorder %s34, 1
    %p489 = por %p487, %p488
    %p491 = scmp.ne.s32.totalorder %s474, %s490
    %p492 = scmp.eq.s32.totalorder %s34, 0
    %p493 = por %p491, %p492
    %s495 = sadd.s32 %s494, 1
    %p498 = scmp.eq.s32.totalorder %s28, 1
    %p499 = scmp.ne.s32.totalorder %s494, %s496
    %p500 = scmp.eq.s32.totalorder %s28, 0
    %p501 = por %p499, %p500
    %p502 = scmp.ne.s32.totalorder %s494, %s496
    %p503 = scmp.eq.s32.totalorder %s33, 1
    %p504 = por %p502, %p503
    %p505 = scmp.ne.s32.totalorder %s496, %s497
    %p506 = scmp.eq.s32.totalorder %s33, 0
    %p507 = por %p505, %p506
    %p508 = scmp.ne.s32.totalorder %s496, %s497
    %p509 = scmp.eq.s32.totalorder %s34, 1
    %p510 = por %p508, %p509
    %p512 = scmp.ne.s32.totalorder %s497, %s511
    %p513 = scmp.eq.s32.totalorder %s34, 0
    %p514 = por %p512, %p513
    %s516 = sadd.s32 %s515, 1
    %p519 = scmp.eq.s32.totalorder %s28, 1
    %p520 = scmp.ne.s32.totalorder %s515, %s517
    %p521 = scmp.eq.s32.totalorder %s28, 0
    %p522 = por %p520, %p521
    %p523 = scmp.ne.s32.totalorder %s515, %s517
    %p524 = scmp.eq.s32.totalorder %s33, 1
    %p525 = por %p523, %p524
    %p526 = scmp.ne.s32.totalorder %s517, %s518
    %p527 = scmp.eq.s32.totalorder %s33, 0
    %p528 = por %p526, %p527
    %p529 = scmp.ne.s32.totalorder %s517, %s518
    %p530 = scmp.eq.s32.totalorder %s34, 1
    %p531 = por %p529, %p530
    %p533 = scmp.ne.s32.totalorder %s518, %s532
    %p534 = scmp.eq.s32.totalorder %s34, 0
    %p535 = por %p533, %p534
    %s537 = sadd.s32 %s536, 1
    %p540 = scmp.eq.s32.totalorder %s28, 1
    %p541 = scmp.ne.s32.totalorder %s536, %s538
    %p542 = scmp.eq.s32.totalorder %s28, 0
    %p543 = por %p541, %p542
    %p544 = scmp.ne.s32.totalorder %s536, %s538
    %p545 = scmp.eq.s32.totalorder %s33, 1
    %p546 = por %p544, %p545
    %p547 = scmp.ne.s32.totalorder %s538, %s539
    %p548 = scmp.eq.s32.totalorder %s33, 0
    %p549 = por %p547, %p548
    %p550 = scmp.ne.s32.totalorder %s538, %s539
    %p551 = scmp.eq.s32.totalorder %s34, 1
    %p552 = por %p550, %p551
    %p554 = scmp.ne.s32.totalorder %s539, %s553
    %p555 = scmp.eq.s32.totalorder %s34, 0
    %p556 = por %p554, %p555
    %p557 = scmp.le.s32.totalorder 1, %s28
    %p558 = scmp.lt.s32.totalorder %s28, 3
    %p559 = pnand %p557, %p558
    %p560 = pneg %p559
    // Predicated region
    $region9: #{reranker_regressor_forward.1} parent=5 // pred_check
      _
    $region10: #{reranker_regressor_forward.1} parent=5 // pred_check_branch
      %562 = sbr.rel (%p559) target = $region12
    $region11: #{reranker_regressor_forward.1} parent=5 // pred_region
      %s563 = ssub.s32 %s28, 1
      // Predicated region
      $region13: #{reranker_regressor_forward.1} parent=11 // pred_check
        %p564 = pneg %p49
      $region14: #{reranker_regressor_forward.1} parent=11 // pred_check_branch
        %566 = sbr.rel (%p564) target = $region16
      $region15: #{reranker_regressor_forward.1} parent=11 // pred_region
        _
      $region16: #{reranker_regressor_forward.1} parent=11 // pred_fallthru
        _
      // Predicated region
      $region17: #{reranker_regressor_forward.1} parent=11 // pred_check
        %p567 = pneg %p70
      $region18: #{reranker_regressor_forward.1} parent=11 // pred_check_branch
        %569 = sbr.rel (%p567) target = $region20
      $region19: #{reranker_regressor_forward.1} parent=11 // pred_region
        _
      $region20: #{reranker_regressor_forward.1} parent=11 // pred_fallthru
        _
      // Predicated region
      $region21: #{reranker_regressor_forward.1} parent=11 // pred_check
        %p570 = pneg %p507
      $region22: #{reranker_regressor_forward.1} parent=11 // pred_check_branch
        %572 = sbr.rel (%p570) target = $region24
      $region23: #{reranker_regressor_forward.1} parent=11 // pred_region
        _
      $region24: #{reranker_regressor_forward.1} parent=11 // pred_fallthru
        _
      // Predicated region
      $region25: #{reranker_regressor_forward.1} parent=11 // pred_check
        %p573 = pneg %p528
      $region26: #{reranker_regressor_forward.1} parent=11 // pred_check_branch
        %575 = sbr.rel (%p573) target = $region28
      $region27: #{reranker_regressor_forward.1} parent=11 // pred_region
        _
      $region28: #{reranker_regressor_forward.1} parent=11 // pred_fallthru
        _
    $region12: #{reranker_regressor_forward.1} parent=5 // pred_fallthru
      _
    %p576 = scmp.lt.s32.totalorder %s28, 2
    // Predicated region
    $region29: #{reranker_regressor_forward.1} parent=5 // pred_check
      %p577 = pneg %p576
    $region30: #{reranker_regressor_forward.1} parent=5 // pred_check_branch
      %579 = sbr.rel (%p577) target = $region32
    $region31: #{reranker_regressor_forward.1} parent=5 // pred_region
      // Predicated region
      $region33: #{reranker_regressor_forward.1} parent=31 // pred_check
        %p580 = pneg %p90
      $region34: #{reranker_regressor_forward.1} parent=31 // pred_check_branch
        %582 = sbr.rel (%p580) target = $region36
      $region35: #{reranker_regressor_forward.1} parent=31 // pred_region
        %p583 = scmp.lt.s32.totalorder %s28, 1
        %s584 = scalar_select %p583, %s28, 1
        %s585 = smul.addr %s584, 4
        %s586 = smul.addr %s585, 8
        %s587 = scalar_lea.vmem %s2, %s586
      $region36: #{reranker_regressor_forward.1} parent=31 // pred_fallthru
        _
      // Predicated region
      $region37: #{reranker_regressor_forward.1} parent=31 // pred_check
        %p588 = pneg %p116
      $region38: #{reranker_regressor_forward.1} parent=31 // pred_check_branch
        %590 = sbr.rel (%p588) target = $region40
      $region39: #{reranker_regressor_forward.1} parent=31 // pred_region
        %p591 = scmp.lt.s32.totalorder %s28, 1
        %s592 = scalar_select %p591, %s28, 1
        %s593 = scalar_lea.vmem %s3, %s592
      $region40: #{reranker_regressor_forward.1} parent=31 // pred_fallthru
        _
      // Predicated region
      $region41: #{reranker_regressor_forward.1} parent=31 // pred_check
        %p594 = pneg %p142
      $region42: #{reranker_regressor_forward.1} parent=31 // pred_check_branch
        %596 = sbr.rel (%p594) target = $region44
      $region43: #{reranker_regressor_forward.1} parent=31 // pred_region
        %p597 = scmp.lt.s32.totalorder %s28, 1
        %s598 = scalar_select %p597, %s28, 1
        %s599 = smul.addr %s598, 4
        %s600 = smul.addr %s599, 8
        %s601 = scalar_lea.vmem %s4, %s600
      $region44: #{reranker_regressor_forward.1} parent=31 // pred_fallthru
        _
      // Predicated region
      $region45: #{reranker_regressor_forward.1} parent=31 // pred_check
        %p602 = pneg %p168
      $region46: #{reranker_regressor_forward.1} parent=31 // pred_check_branch
        %604 = sbr.rel (%p602) target = $region48
      $region47: #{reranker_regressor_forward.1} parent=31 // pred_region
        %p605 = scmp.lt.s32.totalorder %s28, 1
        %s606 = scalar_select %p605, %s28, 1
        %s607 = scalar_lea.vmem %s5, %s606
      $region48: #{reranker_regressor_forward.1} parent=31 // pred_fallthru
        _
      // Predicated region
      $region49: #{reranker_regressor_forward.1} parent=31 // pred_check
        %p608 = pneg %p194
      $region50: #{reranker_regressor_forward.1} parent=31 // pred_check_branch
        %610 = sbr.rel (%p608) target = $region52
      $region51: #{reranker_regressor_forward.1} parent=31 // pred_region
        %p611 = scmp.lt.s32.totalorder %s28, 1
        %s612 = scalar_select %p611, %s28, 1
        %s613 = smul.addr %s612, 4
        %s614 = smul.addr %s613, 8
        %s615 = scalar_lea.vmem %s6, %s614
      $region52: #{reranker_regressor_forward.1} parent=31 // pred_fallthru
        _
      // Predicated region
      $region53: #{reranker_regressor_forward.1} parent=31 // pred_check
        %p616 = pneg %p220
      $region54: #{reranker_regressor_forward.1} parent=31 // pred_check_branch
        %618 = sbr.rel (%p616) target = $region56
      $region55: #{reranker_regressor_forward.1} parent=31 // pred_region
        %p619 = scmp.lt.s32.totalorder %s28, 1
        %s620 = scalar_select %p619, %s28, 1
        %s621 = scalar_lea.vmem %s7, %s620
      $region56: #{reranker_regressor_forward.1} parent=31 // pred_fallthru
        _
      // Predicated region
      $region57: #{reranker_regressor_forward.1} parent=31 // pred_check
        %p622 = pneg %p246
      $region58: #{reranker_regressor_forward.1} parent=31 // pred_check_branch
        %624 = sbr.rel (%p622) target = $region60
      $region59: #{reranker_regressor_forward.1} parent=31 // pred_region
        %p625 = scmp.lt.s32.totalorder %s28, 1
        %s626 = scalar_select %p625, %s28, 1
        %s627 = smul.addr %s626, 4
        %s628 = smul.addr %s627, 8
        %s629 = scalar_lea.vmem %s8, %s628
      $region60: #{reranker_regressor_forward.1} parent=31 // pred_fallthru
        _
      // Predicated region
      $region61: #{reranker_regressor_forward.1} parent=31 // pred_check
        %p630 = pneg %p272
      $region62: #{reranker_regressor_forward.1} parent=31 // pred_check_branch
        %632 = sbr.rel (%p630) target = $region64
      $region63: #{reranker_regressor_forward.1} parent=31 // pred_region
        %p633 = scmp.lt.s32.totalorder %s28, 1
        %s634 = scalar_select %p633, %s28, 1
        %s635 = scalar_lea.vmem %s9, %s634
      $region64: #{reranker_regressor_forward.1} parent=31 // pred_fallthru
        _
      // Predicated region
      $region65: #{reranker_regressor_forward.1} parent=31 // pred_check
        %p636 = pneg %p298
      $region66: #{reranker_regressor_forward.1} parent=31 // pred_check_branch
        %638 = sbr.rel (%p636) target = $region68
      $region67: #{reranker_regressor_forward.1} parent=31 // pred_region
        %p639 = scmp.lt.s32.totalorder %s28, 1
        %s640 = scalar_select %p639, %s28, 1
        %s641 = scalar_lea.vmem %s10, %s640
      $region68: #{reranker_regressor_forward.1} parent=31 // pred_fallthru
        _
      // Predicated region
      $region69: #{reranker_regressor_forward.1} parent=31 // pred_check
        %p642 = pneg %p324
      $region70: #{reranker_regressor_forward.1} parent=31 // pred_check_branch
        %644 = sbr.rel (%p642) target = $region72
      $region71: #{reranker_regressor_forward.1} parent=31 // pred_region
        %p645 = scmp.lt.s32.totalorder %s28, 1
        %s646 = scalar_select %p645, %s28, 1
        %s647 = scalar_lea.vmem %s11, %s646
      $region72: #{reranker_regressor_forward.1} parent=31 // pred_fallthru
        _
      // Predicated region
      $region73: #{reranker_regressor_forward.1} parent=31 // pred_check
        %p648 = pneg %p350
      $region74: #{reranker_regressor_forward.1} parent=31 // pred_check_branch
        %650 = sbr.rel (%p648) target = $region76
      $region75: #{reranker_regressor_forward.1} parent=31 // pred_region
        %p651 = scmp.lt.s32.totalorder %s28, 1
        %s652 = scalar_select %p651, %s28, 1
        %s653 = smul.addr %s652, 4
        %s654 = smul.addr %s653, 8
        %s655 = scalar_lea.vmem %s12, %s654
      $region76: #{reranker_regressor_forward.1} parent=31 // pred_fallthru
        _
      // Predicated region
      $region77: #{reranker_regressor_forward.1} parent=31 // pred_check
        %p656 = pneg %p376
      $region78: #{reranker_regressor_forward.1} parent=31 // pred_check_branch
        %658 = sbr.rel (%p656) target = $region80
      $region79: #{reranker_regressor_forward.1} parent=31 // pred_region
        %p659 = scmp.lt.s32.totalorder %s28, 1
        %s660 = scalar_select %p659, %s28, 1
        %s661 = scalar_lea.vmem %s13, %s660
      $region80: #{reranker_regressor_forward.1} parent=31 // pred_fallthru
        _
      // Predicated region
      $region81: #{reranker_regressor_forward.1} parent=31 // pred_check
        %p662 = pneg %p402
      $region82: #{reranker_regressor_forward.1} parent=31 // pred_check_branch
        %664 = sbr.rel (%p662) target = $region84
      $region83: #{reranker_regressor_forward.1} parent=31 // pred_region
        %p665 = scmp.lt.s32.totalorder %s28, 1
        %s666 = scalar_select %p665, %s28, 1
        %s667 = smul.addr %s666, 8
        %s668 = smul.addr %s667, 8
        %s669 = scalar_lea.vmem %s14, %s668
      $region84: #{reranker_regressor_forward.1} parent=31 // pred_fallthru
        _
      // Predicated region
      $region85: #{reranker_regressor_forward.1} parent=31 // pred_check
        %p670 = pneg %p428
      $region86: #{reranker_regressor_forward.1} parent=31 // pred_check_branch
        %672 = sbr.rel (%p670) target = $region88
      $region87: #{reranker_regressor_forward.1} parent=31 // pred_region
        %p673 = scmp.lt.s32.totalorder %s28, 1
        %s674 = scalar_select %p673, %s28, 1
        %s675 = scalar_lea.vmem %s15, %s674
      $region88: #{reranker_regressor_forward.1} parent=31 // pred_fallthru
        _
      // Predicated region
      $region89: #{reranker_regressor_forward.1} parent=31 // pred_check
        %p676 = pneg %p454
      $region90: #{reranker_regressor_forward.1} parent=31 // pred_check_branch
        %678 = sbr.rel (%p676) target = $region92
      $region91: #{reranker_regressor_forward.1} parent=31 // pred_region
        %p679 = scmp.lt.s32.totalorder %s28, 1
        %s680 = scalar_select %p679, %s28, 1
        %s681 = scalar_lea.vmem %s16, %s680
      $region92: #{reranker_regressor_forward.1} parent=31 // pred_fallthru
        _
      // Predicated region
      $region93: #{reranker_regressor_forward.1} parent=31 // pred_check
        %p682 = pneg %p480
      $region94: #{reranker_regressor_forward.1} parent=31 // pred_check_branch
        %684 = sbr.rel (%p682) target = $region96
      $region95: #{reranker_regressor_forward.1} parent=31 // pred_region
        %p685 = scmp.lt.s32.totalorder %s28, 1
        %s686 = scalar_select %p685, %s28, 1
        %s687 = scalar_lea.vmem %s17, %s686
      $region96: #{reranker_regressor_forward.1} parent=31 // pred_fallthru
        _
    $region32: #{reranker_regressor_forward.1} parent=5 // pred_fallthru
      _
    %p688 = scmp.le.s32.totalorder 1, %s28
    %p689 = scmp.lt.s32.totalorder %s28, 3
    %p690 = pnand %p688, %p689
    %p691 = pneg %p690
    // Predicated region
    $region97: #{reranker_regressor_forward.1} parent=5 // pred_check
      _
    $region98: #{reranker_regressor_forward.1} parent=5 // pred_check_branch
      %693 = sbr.rel (%p690) target = $region100
    $region99: #{reranker_regressor_forward.1} parent=5 // pred_region
      %s694 = ssub.s32 %s28, 1
      %p695 = pneg %p49
      %p696 = pneg %p46
      %p697 = pneg %p70
      %p698 = pneg %p67
      %p699 = scmp.lt.s32.totalorder %s33, 1
      %s700 = scalar_select %p699, %s33, 1
      %s701 = smul.addr %s700, 4
      %s702 = smul.addr %s701, 8
      %s703 = scalar_lea.vmem %s2, %s702
      %p704 = pneg %p96
      %p705 = pneg %p93
      %p706 = scmp.lt.s32.totalorder %s33, 1
      %s707 = scalar_select %p706, %s33, 1
      %s708 = scalar_lea.vmem %s3, %s707
      %p709 = pneg %p122
      %p710 = pneg %p119
      %p711 = scmp.lt.s32.totalorder %s33, 1
      %s712 = scalar_select %p711, %s33, 1
      %s713 = smul.addr %s712, 4
      %s714 = smul.addr %s713, 8
      %s715 = scalar_lea.vmem %s4, %s714
      %p716 = pneg %p148
      %p717 = pneg %p145
      %p718 = scmp.lt.s32.totalorder %s33, 1
      %s719 = scalar_select %p718, %s33, 1
      %s720 = scalar_lea.vmem %s5, %s719
      %p721 = pneg %p174
      %p722 = pneg %p171
      %p723 = scmp.lt.s32.totalorder %s33, 1
      %s724 = scalar_select %p723, %s33, 1
      %s725 = smul.addr %s724, 4
      %s726 = smul.addr %s725, 8
      %s727 = scalar_lea.vmem %s6, %s726
      %p728 = pneg %p200
      %p729 = pneg %p197
      %p730 = scmp.lt.s32.totalorder %s33, 1
      %s731 = scalar_select %p730, %s33, 1
      %s732 = scalar_lea.vmem %s7, %s731
      %p733 = pneg %p226
      %p734 = pneg %p223
      %p735 = scmp.lt.s32.totalorder %s33, 1
      %s736 = scalar_select %p735, %s33, 1
      %s737 = smul.addr %s736, 4
      %s738 = smul.addr %s737, 8
      %s739 = scalar_lea.vmem %s8, %s738
      %p740 = pneg %p252
      %p741 = pneg %p249
      %p742 = scmp.lt.s32.totalorder %s33, 1
      %s743 = scalar_select %p742, %s33, 1
      %s744 = scalar_lea.vmem %s9, %s743
      %p745 = pneg %p278
      %p746 = pneg %p275
      %p747 = scmp.lt.s32.totalorder %s33, 1
      %s748 = scalar_select %p747, %s33, 1
      %s749 = scalar_lea.vmem %s10, %s748
      %p750 = pneg %p304
      %p751 = pneg %p301
      %p752 = scmp.lt.s32.totalorder %s33, 1
      %s753 = scalar_select %p752, %s33, 1
      %s754 = scalar_lea.vmem %s11, %s753
      %p755 = pneg %p330
      %p756 = pneg %p327
      %p757 = scmp.lt.s32.totalorder %s33, 1
      %s758 = scalar_select %p757, %s33, 1
      %s759 = smul.addr %s758, 4
      %s760 = smul.addr %s759, 8
      %s761 = scalar_lea.vmem %s12, %s760
      %p762 = pneg %p356
      %p763 = pneg %p353
      %p764 = scmp.lt.s32.totalorder %s33, 1
      %s765 = scalar_select %p764, %s33, 1
      %s766 = scalar_lea.vmem %s13, %s765
      %p767 = pneg %p382
      %p768 = pneg %p379
      %p769 = scmp.lt.s32.totalorder %s33, 1
      %s770 = scalar_select %p769, %s33, 1
      %s771 = smul.addr %s770, 8
      %s772 = smul.addr %s771, 8
      %s773 = scalar_lea.vmem %s14, %s772
      %p774 = pneg %p408
      %p775 = pneg %p405
      %p776 = scmp.lt.s32.totalorder %s33, 1
      %s777 = scalar_select %p776, %s33, 1
      %s778 = scalar_lea.vmem %s15, %s777
      %p779 = pneg %p434
      %p780 = pneg %p431
      %p781 = scmp.lt.s32.totalorder %s33, 1
      %s782 = scalar_select %p781, %s33, 1
      %s783 = scalar_lea.vmem %s16, %s782
      %p784 = pneg %p460
      %p785 = pneg %p457
      %p786 = scmp.lt.s32.totalorder %s33, 1
      %s787 = scalar_select %p786, %s33, 1
      %s788 = scalar_lea.vmem %s17, %s787
      %p789 = pneg %p486
      %p790 = pneg %p483
      %p791 = pneg %p507
      %p792 = pneg %p504
      %p793 = pneg %p528
      %p794 = pneg %p525
      %p795 = pneg %p549
      %p796 = pneg %p546
      %p797 = scmp.lt.s32.totalorder %s33, 1
      %s798 = scalar_select %p797, %s33, 1
      %s799 = smul.addr %s798, 4
      %s800 = smul.addr %s799, 8
      %s801 = scalar_lea.vmem %s2, %s800
      %p802 = scmp.lt.s32.totalorder %s33, 1
      %s803 = scalar_select %p802, %s33, 1
      %s804 = scalar_lea.vmem %s3, %s803
      %p805 = scmp.lt.s32.totalorder %s33, 1
      %s806 = scalar_select %p805, %s33, 1
      %s807 = smul.addr %s806, 4
      %s808 = smul.addr %s807, 8
      %s809 = scalar_lea.vmem %s4, %s808
      %p810 = scmp.lt.s32.totalorder %s33, 1
      %s811 = scalar_select %p810, %s33, 1
      %s812 = scalar_lea.vmem %s5, %s811
      %p813 = scmp.lt.s32.totalorder %s33, 1
      %s814 = scalar_select %p813, %s33, 1
      %s815 = smul.addr %s814, 4
      %s816 = smul.addr %s815, 8
      %s817 = scalar_lea.vmem %s6, %s816
      %p818 = scmp.lt.s32.totalorder %s33, 1
      %s819 = scalar_select %p818, %s33, 1
      %s820 = scalar_lea.vmem %s7, %s819
      %p821 = scmp.lt.s32.totalorder %s33, 1
      %s822 = scalar_select %p821, %s33, 1
      %s823 = smul.addr %s822, 4
      %s824 = smul.addr %s823, 8
      %s825 = scalar_lea.vmem %s8, %s824
      %p826 = scmp.lt.s32.totalorder %s33, 1
      %s827 = scalar_select %p826, %s33, 1
      %s828 = scalar_lea.vmem %s9, %s827
      %p829 = scmp.lt.s32.totalorder %s33, 1
      %s830 = scalar_select %p829, %s33, 1
      %s831 = scalar_lea.vmem %s10, %s830
      %p832 = scmp.lt.s32.totalorder %s33, 1
      %s833 = scalar_select %p832, %s33, 1
      %s834 = scalar_lea.vmem %s11, %s833
      %p835 = scmp.lt.s32.totalorder %s33, 1
      %s836 = scalar_select %p835, %s33, 1
      %s837 = smul.addr %s836, 4
      %s838 = smul.addr %s837, 8
      %s839 = scalar_lea.vmem %s12, %s838
      %p840 = scmp.lt.s32.totalorder %s33, 1
      %s841 = scalar_select %p840, %s33, 1
      %s842 = scalar_lea.vmem %s13, %s841
      %p843 = scmp.lt.s32.totalorder %s33, 1
      %s844 = scalar_select %p843, %s33, 1
      %s845 = smul.addr %s844, 8
      %s846 = smul.addr %s845, 8
      %s847 = scalar_lea.vmem %s14, %s846
      %p848 = scmp.lt.s32.totalorder %s33, 1
      %s849 = scalar_select %p848, %s33, 1
      %s850 = scalar_lea.vmem %s15, %s849
      %p851 = scmp.lt.s32.totalorder %s33, 1
      %s852 = scalar_select %p851, %s33, 1
      %s853 = scalar_lea.vmem %s16, %s852
      %p854 = scmp.lt.s32.totalorder %s33, 1
      %s855 = scalar_select %p854, %s33, 1
      %s856 = scalar_lea.vmem %s17, %s855
      %p857 = scmp.eq.s32.totalorder %s33, 0
      // Predicated region
      $region101: #{reranker_regressor_forward.1} parent=99 // pred_check
        %p858 = pneg %p857
      $region102: #{reranker_regressor_forward.1} parent=99 // pred_check_branch
        %860 = sbr.rel (%p858) target = $region104
      $region103: #{reranker_regressor_forward.1} parent=99 // pred_region
        %v861 = vld [vmem:[%s0] sm:$0xff]
        %v862 = vld [vmem:[%s0 + $0x8] sm:$0xff]
        %vm863 = vcmask 261120
        %864 = vst.msk [vmem:[#allocation2] sm:$0xff] %vm863, %v861
        %865 = vst.msk [vmem:[#allocation2 + $0x8] sm:$0xff] %vm863, %v862
      $region104: #{reranker_regressor_forward.1} parent=99 // pred_fallthru
        _
      %v866 = vld [vmem:[#allocation2] sm:$0xff]
      %v867 = vld [vmem:[#allocation2 + $0x8] sm:$0xff]
      %v868 = vld [vmem:[%s1] sm:$0x3]
      %v871 = vunpack.c.l.s4 1966171168
      %v872 = vunpack.c.0.s8 %v871
      %v873 = vlaneseq
      %v874 = vshrl.u32 %v873, 7
      %v875 = vsub.s32 %v872, %v874
      %v876 = vrot.slane %v868, %v875
      %v877 = vcombine.high %v876, %v876
      %v879 = vunpack.c.l.s4 1966171168
      %v880 = vunpack.c.0.s8 %v879
      %v881 = vlaneseq
      %v882 = vshrl.u32 %v881, 7
      %v883 = vsub.s32 %v880, %v882
      %v884 = vrot.slane %v876, %v883
      %v886 = vunpack.c.l.s4 1966171168
      %v887 = vunpack.c.0.s8 %v886
      %v888 = vlaneseq
      %v889 = vshrl.u32 %v888, 7
      %v890 = vsub.s32 %v887, %v889
      %v891 = vrot.slane %v877, %v890
      %v892 = vld [vmem:[%s801] sm:$0xff]
      %v893 = vld [vmem:[%s801 + $0x8] sm:$0xff]
      %v894 = vld [vmem:[%s801 + $0x10] sm:$0xff]
      %v895 = vld [vmem:[%s801 + $0x18] sm:$0xff]
      %v896 = vld [vmem:[%s804] sm:$0x1]
      %v897 = vld [vmem:[%s809] sm:$0xff]
      %v898 = vld [vmem:[%s809 + $0x8] sm:$0xff]
      %v899 = vld [vmem:[%s809 + $0x10] sm:$0xff]
      %v900 = vld [vmem:[%s809 + $0x18] sm:$0xff]
      %v901 = vld [vmem:[%s812] sm:$0x1]
      %v902 = vld [vmem:[%s817] sm:$0xff]
      %v903 = vld [vmem:[%s817 + $0x8] sm:$0xff]
      %v904 = vld [vmem:[%s817 + $0x10] sm:$0xff]
      %v905 = vld [vmem:[%s817 + $0x18] sm:$0xff]
      %v906 = vld [vmem:[%s820] sm:$0x1]
      %v907 = vld [vmem:[%s825] sm:$0xff]
      %v908 = vld [vmem:[%s825 + $0x8] sm:$0xff]
      %v909 = vld [vmem:[%s825 + $0x10] sm:$0xff]
      %v910 = vld [vmem:[%s825 + $0x18] sm:$0xff]
      %v911 = vld [vmem:[%s828] sm:$0x1]
      %v913 = vlaneseq
      %v914 = vshrl.u32 %v913, 7
      %v915 = vsub.s32 0, %v914
      %v916 = vrot.slane %v896, %v915
      %vm918 = vcmask 261120
      %v920 = vsel %vm918, %v866, 0
      %v923 = vsel %vm918, %v867, 0
      %925 = vmatprep.subr.mxu0 0.0
      %926 = vmatpush1.msra.mxu0 %v892
      %927 = vmatprep.subr.mxu0 0.0
      %928 = vmatpush1.msra.mxu0 %v893
      %929 = vmatprep.subr.mxu0 0.0
      %930 = vmatpush1.msra.mxu0 %v894
      %931 = vmatprep.subr.mxu0 0.0
      %932 = vmatpush1.msra.mxu0 %v895
      %933 = vmatprep.subr.mxu0 0.0
      %934 = vmatpush1.msra.mxu0 0.0
      %935 = vmatprep.subr.mxu0 0.0
      %936 = vmatpush1.msra.mxu0 0.0
      %937 = vmatprep.subr.mxu0 0.0
      %938 = vmatpush1.msra.mxu0 0.0
      %939 = vmatprep.subr.mxu0 0.0
      %940 = vmatpush1.msra.mxu0 0.0
      %941 = vmatprep.subr.mxu0 0.0
      %942 = vmatpush1.msra.mxu0 0.0
      %943 = vmatprep.subr.mxu0 0.0
      %944 = vmatpush1.msra.mxu0 0.0
      %945 = vmatprep.subr.mxu0 0.0
      %946 = vmatpush1.msra.mxu0 0.0
      %947 = vmatprep.subr.mxu0 0.0
      %948 = vmatpush1.msra.mxu0 0.0
      %949 = vmatprep.subr.mxu0 0.0
      %950 = vmatpush1.msra.mxu0 0.0
      %951 = vmatprep.subr.mxu0 0.0
      %952 = vmatpush1.msra.mxu0 0.0
      %953 = vmatprep.subr.mxu0 0.0
      %954 = vmatpush1.msra.mxu0 0.0
      %955 = vmatprep.subr.mxu0 0.0
      %956 = vmatpush1.msra.mxu0 0.0
      %957 = vmatprep.subr.mxu0 0.0
      %958 = vmatpush1.msra.mxu0 0.0
      %959 = vmatprep.subr.mxu0 0.0
      %960 = vmatpush1.msra.mxu0 0.0
      %961 = vmatprep.subr.mxu0 0.0
      %962 = vmatpush1.msra.mxu0 0.0
      %963 = vmatprep.subr.mxu0 0.0
      %964 = vmatpush1.msra.mxu0 0.0
      %965 = vmatprep.subr.mxu0 0.0
      %966 = vmatpush1.msra.mxu0 0.0
      %967 = vmatprep.subr.mxu0 0.0
      %968 = vmatpush1.msra.mxu0 0.0
      %969 = vmatprep.subr.mxu0 0.0
      %970 = vmatpush1.msra.mxu0 0.0
      %971 = vmatprep.subr.mxu0 0.0
      %972 = vmatpush1.msra.mxu0 0.0
      %973 = vmatprep.subr.mxu0 0.0
      %974 = vmatpush1.msra.mxu0 0.0
      %975 = vmatprep.subr.mxu0 0.0
      %976 = vmatpush1.msra.mxu0 0.0
      %977 = vmatprep.subr.mxu0 0.0
      %978 = vmatpush1.msra.mxu0 0.0
      %979 = vmatprep.subr.mxu0 0.0
      %980 = vmatpush1.msra.mxu0 0.0
      %981 = vmatprep.subr.mxu0 0.0
      %982 = vmatpush1.msra.mxu0 0.0
      %983 = vmatprep.subr.mxu0 0.0
      %984 = vmatpush1.msra.mxu0 0.0
      %985 = vmatprep.subr.mxu0 0.0
      %986 = vmatpush1.msra.mxu0 0.0
      %987 = vmatprep.subr.mxu0 0.0
      %988 = vmatpush1.msra.mxu0 0.0
      %989 = vmatprep.mubr.f32.mxu0 0.0
      %990 = vmatmul.mubr.f32.gmra.mrb[0].mxu0 %v920
      %v991 = vpop.f32.mrb[0].mxu0
      %v992 = vadd.f32 %v916, %v991
      %v993 = vpop.f32.mrb[0].mxu0
      %994 = vmatprep.mubr.f32.mxu0 0.0
      %995 = vmatmul.mubr.f32.gmra.mrb[0].mxu0 %v923
      %v996 = vpop.f32.mrb[0].mxu0
      %v997 = vadd.f32 %v916, %v996
      %v998 = vpop.f32.mrb[0].mxu0
      %999 = vdwg.mxu0
      %v1001 = vlaneseq
      %v1002 = vshrl.u32 %v1001, 7
      %v1003 = vsub.s32 0, %v1002
      %v1004 = vrot.slane %v901, %v1003
      %1006 = vmatprep.subr.mxu0 0.0
      %1007 = vmatpush1.msra.mxu0 %v897
      %1008 = vmatprep.subr.mxu0 0.0
      %1009 = vmatpush1.msra.mxu0 %v898
      %1010 = vmatprep.subr.mxu0 0.0
      %1011 = vmatpush1.msra.mxu0 %v899
      %1012 = vmatprep.subr.mxu0 0.0
      %1013 = vmatpush1.msra.mxu0 %v900
      %1014 = vmatprep.subr.mxu0 0.0
      %1015 = vmatpush1.msra.mxu0 0.0
      %1016 = vmatprep.subr.mxu0 0.0
      %1017 = vmatpush1.msra.mxu0 0.0
      %1018 = vmatprep.subr.mxu0 0.0
      %1019 = vmatpush1.msra.mxu0 0.0
      %1020 = vmatprep.subr.mxu0 0.0
      %1021 = vmatpush1.msra.mxu0 0.0
      %1022 = vmatprep.subr.mxu0 0.0
      %1023 = vmatpush1.msra.mxu0 0.0
      %1024 = vmatprep.subr.mxu0 0.0
      %1025 = vmatpush1.msra.mxu0 0.0
      %1026 = vmatprep.subr.mxu0 0.0
      %1027 = vmatpush1.msra.mxu0 0.0
      %1028 = vmatprep.subr.mxu0 0.0
      %1029 = vmatpush1.msra.mxu0 0.0
      %1030 = vmatprep.subr.mxu0 0.0
      %1031 = vmatpush1.msra.mxu0 0.0
      %1032 = vmatprep.subr.mxu0 0.0
      %1033 = vmatpush1.msra.mxu0 0.0
      %1034 = vmatprep.subr.mxu0 0.0
      %1035 = vmatpush1.msra.mxu0 0.0
      %1036 = vmatprep.subr.mxu0 0.0
      %1037 = vmatpush1.msra.mxu0 0.0
      %1038 = vmatprep.subr.mxu0 0.0
      %1039 = vmatpush1.msra.mxu0 0.0
      %1040 = vmatprep.subr.mxu0 0.0
      %1041 = vmatpush1.msra.mxu0 0.0
      %1042 = vmatprep.subr.mxu0 0.0
      %1043 = vmatpush1.msra.mxu0 0.0
      %1044 = vmatprep.subr.mxu0 0.0
      %1045 = vmatpush1.msra.mxu0 0.0
      %1046 = vmatprep.subr.mxu0 0.0
      %1047 = vmatpush1.msra.mxu0 0.0
      %1048 = vmatprep.subr.mxu0 0.0
      %1049 = vmatpush1.msra.mxu0 0.0
      %1050 = vmatprep.subr.mxu0 0.0
      %1051 = vmatpush1.msra.mxu0 0.0
      %1052 = vmatprep.subr.mxu0 0.0
      %1053 = vmatpush1.msra.mxu0 0.0
      %1054 = vmatprep.subr.mxu0 0.0
      %1055 = vmatpush1.msra.mxu0 0.0
      %1056 = vmatprep.subr.mxu0 0.0
      %1057 = vmatpush1.msra.mxu0 0.0
      %1058 = vmatprep.subr.mxu0 0.0
      %1059 = vmatpush1.msra.mxu0 0.0
      %1060 = vmatprep.subr.mxu0 0.0
      %1061 = vmatpush1.msra.mxu0 0.0
      %1062 = vmatprep.subr.mxu0 0.0
      %1063 = vmatpush1.msra.mxu0 0.0
      %1064 = vmatprep.subr.mxu0 0.0
      %1065 = vmatpush1.msra.mxu0 0.0
      %1066 = vmatprep.subr.mxu0 0.0
      %1067 = vmatpush1.msra.mxu0 0.0
      %1068 = vmatprep.subr.mxu0 0.0
      %1069 = vmatpush1.msra.mxu0 0.0
      %1070 = vmatprep.mubr.f32.mxu0 0.0
      %1071 = vmatmul.mubr.f32.gmra.mrb[0].mxu0 %v920
      %v1072 = vpop.f32.mrb[0].mxu0
      %v1073 = vadd.f32 %v1004, %v1072
      %v1074 = vpop.f32.mrb[0].mxu0
      %1075 = vmatprep.mubr.f32.mxu0 0.0
      %1076 = vmatmul.mubr.f32.gmra.mrb[0].mxu0 %v923
      %v1077 = vpop.f32.mrb[0].mxu0
      %v1078 = vadd.f32 %v1004, %v1077
      %v1079 = vpop.f32.mrb[0].mxu0
      %1080 = vdwg.mxu0
      %v1082 = vlaneseq
      %v1083 = vshrl.u32 %v1082, 7
      %v1084 = vsub.s32 0, %v1083
      %v1085 = vrot.slane %v906, %v1084
      %1087 = vmatprep.subr.mxu0 0.0
      %1088 = vmatpush1.msra.mxu0 %v902
      %1089 = vmatprep.subr.mxu0 0.0
      %1090 = vmatpush1.msra.mxu0 %v903
      %1091 = vmatprep.subr.mxu0 0.0
      %1092 = vmatpush1.msra.mxu0 %v904
      %1093 = vmatprep.subr.mxu0 0.0
      %1094 = vmatpush1.msra.mxu0 %v905
      %1095 = vmatprep.subr.mxu0 0.0
      %1096 = vmatpush1.msra.mxu0 0.0
      %1097 = vmatprep.subr.mxu0 0.0
      %1098 = vmatpush1.msra.mxu0 0.0
      %1099 = vmatprep.subr.mxu0 0.0
      %1100 = vmatpush1.msra.mxu0 0.0
      %1101 = vmatprep.subr.mxu0 0.0
      %1102 = vmatpush1.msra.mxu0 0.0
      %1103 = vmatprep.subr.mxu0 0.0
      %1104 = vmatpush1.msra.mxu0 0.0
      %1105 = vmatprep.subr.mxu0 0.0
      %1106 = vmatpush1.msra.mxu0 0.0
      %1107 = vmatprep.subr.mxu0 0.0
      %1108 = vmatpush1.msra.mxu0 0.0
      %1109 = vmatprep.subr.mxu0 0.0
      %1110 = vmatpush1.msra.mxu0 0.0
      %1111 = vmatprep.subr.mxu0 0.0
      %1112 = vmatpush1.msra.mxu0 0.0
      %1113 = vmatprep.subr.mxu0 0.0
      %1114 = vmatpush1.msra.mxu0 0.0
      %1115 = vmatprep.subr.mxu0 0.0
      %1116 = vmatpush1.msra.mxu0 0.0
      %1117 = vmatprep.subr.mxu0 0.0
      %1118 = vmatpush1.msra.mxu0 0.0
      %1119 = vmatprep.subr.mxu0 0.0
      %1120 = vmatpush1.msra.mxu0 0.0
      %1121 = vmatprep.subr.mxu0 0.0
      %1122 = vmatpush1.msra.mxu0 0.0
      %1123 = vmatprep.subr.mxu0 0.0
      %1124 = vmatpush1.msra.mxu0 0.0
      %1125 = vmatprep.subr.mxu0 0.0
      %1126 = vmatpush1.msra.mxu0 0.0
      %1127 = vmatprep.subr.mxu0 0.0
      %1128 = vmatpush1.msra.mxu0 0.0
      %1129 = vmatprep.subr.mxu0 0.0
      %1130 = vmatpush1.msra.mxu0 0.0
      %1131 = vmatprep.subr.mxu0 0.0
      %1132 = vmatpush1.msra.mxu0 0.0
      %1133 = vmatprep.subr.mxu0 0.0
      %1134 = vmatpush1.msra.mxu0 0.0
      %1135 = vmatprep.subr.mxu0 0.0
      %1136 = vmatpush1.msra.mxu0 0.0
      %1137 = vmatprep.subr.mxu0 0.0
      %1138 = vmatpush1.msra.mxu0 0.0
      %1139 = vmatprep.subr.mxu0 0.0
      %1140 = vmatpush1.msra.mxu0 0.0
      %1141 = vmatprep.subr.mxu0 0.0
      %1142 = vmatpush1.msra.mxu0 0.0
      %1143 = vmatprep.subr.mxu0 0.0
      %1144 = vmatpush1.msra.mxu0 0.0
      %1145 = vmatprep.subr.mxu0 0.0
      %1146 = vmatpush1.msra.mxu0 0.0
      %1147 = vmatprep.subr.mxu0 0.0
      %1148 = vmatpush1.msra.mxu0 0.0
      %1149 = vmatprep.subr.mxu0 0.0
      %1150 = vmatpush1.msra.mxu0 0.0
      %1151 = vmatprep.mubr.f32.mxu0 0.0
      %1152 = vmatmul.mubr.f32.gmra.mrb[0].mxu0 %v920
      %v1153 = vpop.f32.mrb[0].mxu0
      %v1154 = vadd.f32 %v1085, %v1153
      %v1155 = vpop.f32.mrb[0].mxu0
      %1156 = vmatprep.mubr.f32.mxu0 0.0
      %1157 = vmatmul.mubr.f32.gmra.mrb[0].mxu0 %v923
      %v1158 = vpop.f32.mrb[0].mxu0
      %v1159 = vadd.f32 %v1085, %v1158
      %v1160 = vpop.f32.mrb[0].mxu0
      %1161 = vdwg.mxu0
      %vm1162 = vcmask 130048
      %v1164 = vsel %vm1162, %v992, 0
      %v1167 = vsel %vm1162, %v1073, 0
      %1169 = vmatprep.subr.mxu0 0.0
      %1170 = vmatpush1.xpose.msra.mxu0 %v1167
      %1171 = vmatprep.subr.mxu0 0.0
      %1172 = vmatpush1.xpose.msra.mxu0 0.0
      %1173 = vmatprep.subr.mxu0 0.0
      %1174 = vmatpush1.xpose.msra.mxu0 0.0
      %1175 = vmatprep.subr.mxu0 0.0
      %1176 = vmatpush1.xpose.msra.mxu0 0.0
      %1177 = vmatprep.subr.mxu0 0.0
      %1178 = vmatpush1.xpose.msra.mxu0 0.0
      %1179 = vmatprep.subr.mxu0 0.0
      %1180 = vmatpush1.xpose.msra.mxu0 0.0
      %1181 = vmatprep.subr.mxu0 0.0
      %1182 = vmatpush1.xpose.msra.mxu0 0.0
      %1183 = vmatprep.subr.mxu0 0.0
      %1184 = vmatpush1.xpose.msra.mxu0 0.0
      %1185 = vmatprep.subr.mxu0 0.0
      %1186 = vmatpush1.xpose.msra.mxu0 0.0
      %1187 = vmatprep.subr.mxu0 0.0
      %1188 = vmatpush1.xpose.msra.mxu0 0.0
      %1189 = vmatprep.subr.mxu0 0.0
      %1190 = vmatpush1.xpose.msra.mxu0 0.0
      %1191 = vmatprep.subr.mxu0 0.0
      %1192 = vmatpush1.xpose.msra.mxu0 0.0
      %1193 = vmatprep.subr.mxu0 0.0
      %1194 = vmatpush1.xpose.msra.mxu0 0.0
      %1195 = vmatprep.subr.mxu0 0.0
      %1196 = vmatpush1.xpose.msra.mxu0 0.0
      %1197 = vmatprep.subr.mxu0 0.0
      %1198 = vmatpush1.xpose.msra.mxu0 0.0
      %1199 = vmatprep.subr.mxu0 0.0
      %1200 = vmatpush1.xpose.msra.mxu0 0.0
      %1201 = vmatprep.subr.mxu0 0.0
      %1202 = vmatpush1.xpose.msra.mxu0 0.0
      %1203 = vmatprep.subr.mxu0 0.0
      %1204 = vmatpush1.xpose.msra.mxu0 0.0
      %1205 = vmatprep.subr.mxu0 0.0
      %1206 = vmatpush1.xpose.msra.mxu0 0.0
      %1207 = vmatprep.subr.mxu0 0.0
      %1208 = vmatpush1.xpose.msra.mxu0 0.0
      %1209 = vmatprep.subr.mxu0 0.0
      %1210 = vmatpush1.xpose.msra.mxu0 0.0
      %1211 = vmatprep.subr.mxu0 0.0
      %1212 = vmatpush1.xpose.msra.mxu0 0.0
      %1213 = vmatprep.subr.mxu0 0.0
      %1214 = vmatpush1.xpose.msra.mxu0 0.0
      %1215 = vmatprep.subr.mxu0 0.0
      %1216 = vmatpush1.xpose.msra.mxu0 0.0
      %1217 = vmatprep.subr.mxu0 0.0
      %1218 = vmatpush1.xpose.msra.mxu0 0.0
      %1219 = vmatprep.subr.mxu0 0.0
      %1220 = vmatpush1.xpose.msra.mxu0 0.0
      %1221 = vmatprep.subr.mxu0 0.0
      %1222 = vmatpush1.xpose.msra.mxu0 0.0
      %1223 = vmatprep.subr.mxu0 0.0
      %1224 = vmatpush1.xpose.msra.mxu0 0.0
      %1225 = vmatprep.subr.mxu0 0.0
      %1226 = vmatpush1.xpose.msra.mxu0 0.0
      %1227 = vmatprep.subr.mxu0 0.0
      %1228 = vmatpush1.xpose.msra.mxu0 0.0
      %1229 = vmatprep.subr.mxu0 0.0
      %1230 = vmatpush1.xpose.msra.mxu0 0.0
      %1231 = vmatprep.subr.mxu0 0.0
      %1232 = vmatpush1.xpose.msra.mxu0 0.0
      %1233 = vmatprep.mubr.f32.mxu0 0.0
      %1234 = vmatmul.mubr.f32.gmra.mrb[0].mxu0 %v1164
      %v1235 = vpop.f32.mrb[0].mxu0
      %v1236 = vadd.f32 0.0, %v1235
      %v1237 = vpop.f32.mrb[0].mxu0
      %1238 = vdwg.mxu0
      %v1240 = vsel %vm1162, %v997, 0
      %v1243 = vsel %vm1162, %v1078, 0
      %1245 = vmatprep.subr.mxu0 0.0
      %1246 = vmatpush1.xpose.msra.mxu0 %v1243
      %1247 = vmatprep.subr.mxu0 0.0
      %1248 = vmatpush1.xpose.msra.mxu0 0.0
      %1249 = vmatprep.subr.mxu0 0.0
      %1250 = vmatpush1.xpose.msra.mxu0 0.0
      %1251 = vmatprep.subr.mxu0 0.0
      %1252 = vmatpush1.xpose.msra.mxu0 0.0
      %1253 = vmatprep.subr.mxu0 0.0
      %1254 = vmatpush1.xpose.msra.mxu0 0.0
      %1255 = vmatprep.subr.mxu0 0.0
      %1256 = vmatpush1.xpose.msra.mxu0 0.0
      %1257 = vmatprep.subr.mxu0 0.0
      %1258 = vmatpush1.xpose.msra.mxu0 0.0
      %1259 = vmatprep.subr.mxu0 0.0
      %1260 = vmatpush1.xpose.msra.mxu0 0.0
      %1261 = vmatprep.subr.mxu0 0.0
      %1262 = vmatpush1.xpose.msra.mxu0 0.0
      %1263 = vmatprep.subr.mxu0 0.0
      %1264 = vmatpush1.xpose.msra.mxu0 0.0
      %1265 = vmatprep.subr.mxu0 0.0
      %1266 = vmatpush1.xpose.msra.mxu0 0.0
      %1267 = vmatprep.subr.mxu0 0.0
      %1268 = vmatpush1.xpose.msra.mxu0 0.0
      %1269 = vmatprep.subr.mxu0 0.0
      %1270 = vmatpush1.xpose.msra.mxu0 0.0
      %1271 = vmatprep.subr.mxu0 0.0
      %1272 = vmatpush1.xpose.msra.mxu0 0.0
      %1273 = vmatprep.subr.mxu0 0.0
      %1274 = vmatpush1.xpose.msra.mxu0 0.0
      %1275 = vmatprep.subr.mxu0 0.0
      %1276 = vmatpush1.xpose.msra.mxu0 0.0
      %1277 = vmatprep.subr.mxu0 0.0
      %1278 = vmatpush1.xpose.msra.mxu0 0.0
      %1279 = vmatprep.subr.mxu0 0.0
      %1280 = vmatpush1.xpose.msra.mxu0 0.0
      %1281 = vmatprep.subr.mxu0 0.0
      %1282 = vmatpush1.xpose.msra.mxu0 0.0
      %1283 = vmatprep.subr.mxu0 0.0
      %1284 = vmatpush1.xpose.msra.mxu0 0.0
      %1285 = vmatprep.subr.mxu0 0.0
      %1286 = vmatpush1.xpose.msra.mxu0 0.0
      %1287 = vmatprep.subr.mxu0 0.0
      %1288 = vmatpush1.xpose.msra.mxu0 0.0
      %1289 = vmatprep.subr.mxu0 0.0
      %1290 = vmatpush1.xpose.msra.mxu0 0.0
      %1291 = vmatprep.subr.mxu0 0.0
      %1292 = vmatpush1.xpose.msra.mxu0 0.0
      %1293 = vmatprep.subr.mxu0 0.0
      %1294 = vmatpush1.xpose.msra.mxu0 0.0
      %1295 = vmatprep.subr.mxu0 0.0
      %1296 = vmatpush1.xpose.msra.mxu0 0.0
      %1297 = vmatprep.subr.mxu0 0.0
      %1298 = vmatpush1.xpose.msra.mxu0 0.0
      %1299 = vmatprep.subr.mxu0 0.0
      %1300 = vmatpush1.xpose.msra.mxu0 0.0
      %1301 = vmatprep.subr.mxu0 0.0
      %1302 = vmatpush1.xpose.msra.mxu0 0.0
      %1303 = vmatprep.subr.mxu0 0.0
      %1304 = vmatpush1.xpose.msra.mxu0 0.0
      %1305 = vmatprep.subr.mxu0 0.0
      %1306 = vmatpush1.xpose.msra.mxu0 0.0
      %1307 = vmatprep.subr.mxu0 0.0
      %1308 = vmatpush1.xpose.msra.mxu0 0.0
      %1309 = vmatprep.mubr.f32.mxu0 0.0
      %1310 = vmatmul.mubr.f32.gmra.mrb[0].mxu0 %v1240
      %v1311 = vpop.f32.mrb[0].mxu0
      %v1312 = vadd.f32 0.0, %v1311
      %v1313 = vpop.f32.mrb[0].mxu0
      %1314 = vdwg.mxu0
      %v1315 = vmul.f32 %v1236, 0.25
      %v1316 = vmul.f32 %v1312, 0.25
      %v1317 = vlaneseq
      %v1318 = vshrl.u32 %v1317, 7
      %v1319 = vsub.s32 0, %v1318
      %v1320 = vrot.slane %v884, %v1319
      %v1321 = vlaneseq
      %v1322 = vshrl.u32 %v1321, 7
      %v1323 = vsub.s32 0, %v1322
      %v1324 = vrot.slane %v891, %v1323
      %v1327 = vadd.f32 %v1315, %v1320
      %v1328 = vadd.f32 %v1316, %v1324
      %vm1329 = vcmask 64512
      %v1330 = vsel %vm1329, %v1327, -inf
      %1331 = vmax.xlane.f32.xlu0 %v1330
      %v1332 = vpop.xlane.xlu0 %1331
      %v1333 = vsel %vm1329, %v1328, -inf
      %1334 = vmax.xlane.f32.xlu0 %v1333
      %v1335 = vpop.xlane.xlu0 %1334
      %v1336 = vsub.f32 %v1327, %v1332
      %v1337 = vsub.f32 %v1328, %v1335
      %v1338 = vmul.f32 %v1336, 1.442695
      %v1339 = vpow.pop %v1338
      %v1340 = vmul.f32 %v1337, 1.442695
      %v1341 = vpow.pop %v1340
      %v1342 = vsel %vm1329, %v1339, 0.0
      %1343 = vadd.xlane.f32.xlu0 %v1342
      %v1344 = vpop.xlane.xlu0 %1343
      %v1345 = vsel %vm1329, %v1341, 0.0
      %1346 = vadd.xlane.f32.xlu0 %v1345
      %v1347 = vpop.xlane.xlu0 %1346
      %v1348 = vrcp.pop %v1344
      %v1349 = vrcp.pop %v1347
      %v1350 = vmul.f32 %v1339, %v1348
      %v1351 = vmul.f32 %v1341, %v1349
      %v1353 = vsel %vm1329, %v1350, 0
      %1355 = vmatprep.subr.mxu0 0.0
      %1356 = vmatpush1.msra.mxu0 %v1154
      %1357 = vmatprep.subr.mxu0 0.0
      %1358 = vmatpush1.msra.mxu0 0.0
      %1359 = vmatprep.subr.mxu0 0.0
      %1360 = vmatpush1.msra.mxu0 0.0
      %1361 = vmatprep.subr.mxu0 0.0
      %1362 = vmatpush1.msra.mxu0 0.0
      %1363 = vmatprep.subr.mxu0 0.0
      %1364 = vmatpush1.msra.mxu0 0.0
      %1365 = vmatprep.subr.mxu0 0.0
      %1366 = vmatpush1.msra.mxu0 0.0
      %1367 = vmatprep.subr.mxu0 0.0
      %1368 = vmatpush1.msra.mxu0 0.0
      %1369 = vmatprep.subr.mxu0 0.0
      %1370 = vmatpush1.msra.mxu0 0.0
      %1371 = vmatprep.subr.mxu0 0.0
      %1372 = vmatpush1.msra.mxu0 0.0
      %1373 = vmatprep.subr.mxu0 0.0
      %1374 = vmatpush1.msra.mxu0 0.0
      %1375 = vmatprep.subr.mxu0 0.0
      %1376 = vmatpush1.msra.mxu0 0.0
      %1377 = vmatprep.subr.mxu0 0.0
      %1378 = vmatpush1.msra.mxu0 0.0
      %1379 = vmatprep.subr.mxu0 0.0
      %1380 = vmatpush1.msra.mxu0 0.0
      %1381 = vmatprep.subr.mxu0 0.0
      %1382 = vmatpush1.msra.mxu0 0.0
      %1383 = vmatprep.subr.mxu0 0.0
      %1384 = vmatpush1.msra.mxu0 0.0
      %1385 = vmatprep.subr.mxu0 0.0
      %1386 = vmatpush1.msra.mxu0 0.0
      %1387 = vmatprep.subr.mxu0 0.0
      %1388 = vmatpush1.msra.mxu0 0.0
      %1389 = vmatprep.subr.mxu0 0.0
      %1390 = vmatpush1.msra.mxu0 0.0
      %1391 = vmatprep.subr.mxu0 0.0
      %1392 = vmatpush1.msra.mxu0 0.0
      %1393 = vmatprep.subr.mxu0 0.0
      %1394 = vmatpush1.msra.mxu0 0.0
      %1395 = vmatprep.subr.mxu0 0.0
      %1396 = vmatpush1.msra.mxu0 0.0
      %1397 = vmatprep.subr.mxu0 0.0
      %1398 = vmatpush1.msra.mxu0 0.0
      %1399 = vmatprep.subr.mxu0 0.0
      %1400 = vmatpush1.msra.mxu0 0.0
      %1401 = vmatprep.subr.mxu0 0.0
      %1402 = vmatpush1.msra.mxu0 0.0
      %1403 = vmatprep.subr.mxu0 0.0
      %1404 = vmatpush1.msra.mxu0 0.0
      %1405 = vmatprep.subr.mxu0 0.0
      %1406 = vmatpush1.msra.mxu0 0.0
      %1407 = vmatprep.subr.mxu0 0.0
      %1408 = vmatpush1.msra.mxu0 0.0
      %1409 = vmatprep.subr.mxu0 0.0
      %1410 = vmatpush1.msra.mxu0 0.0
      %1411 = vmatprep.subr.mxu0 0.0
      %1412 = vmatpush1.msra.mxu0 0.0
      %1413 = vmatprep.subr.mxu0 0.0
      %1414 = vmatpush1.msra.mxu0 0.0
      %1415 = vmatprep.subr.mxu0 0.0
      %1416 = vmatpush1.msra.mxu0 0.0
      %1417 = vmatprep.subr.mxu0 0.0
      %1418 = vmatpush1.msra.mxu0 0.0
      %1419 = vmatprep.mubr.f32.mxu0 0.0
      %1420 = vmatmul.mubr.f32.gmra.mrb[0].mxu0 %v1353
      %v1421 = vpop.f32.mrb[0].mxu0
      %v1422 = vadd.f32 0.0, %v1421
      %v1423 = vpop.f32.mrb[0].mxu0
      %1424 = vdwg.mxu0
      %v1426 = vsel %vm1329, %v1351, 0
      %1428 = vmatprep.subr.mxu0 0.0
      %1429 = vmatpush1.msra.mxu0 %v1159
      %1430 = vmatprep.subr.mxu0 0.0
      %1431 = vmatpush1.msra.mxu0 0.0
      %1432 = vmatprep.subr.mxu0 0.0
      %1433 = vmatpush1.msra.mxu0 0.0
      %1434 = vmatprep.subr.mxu0 0.0
      %1435 = vmatpush1.msra.mxu0 0.0
      %1436 = vmatprep.subr.mxu0 0.0
      %1437 = vmatpush1.msra.mxu0 0.0
      %1438 = vmatprep.subr.mxu0 0.0
      %1439 = vmatpush1.msra.mxu0 0.0
      %1440 = vmatprep.subr.mxu0 0.0
      %1441 = vmatpush1.msra.mxu0 0.0
      %1442 = vmatprep.subr.mxu0 0.0
      %1443 = vmatpush1.msra.mxu0 0.0
      %1444 = vmatprep.subr.mxu0 0.0
      %1445 = vmatpush1.msra.mxu0 0.0
      %1446 = vmatprep.subr.mxu0 0.0
      %1447 = vmatpush1.msra.mxu0 0.0
      %1448 = vmatprep.subr.mxu0 0.0
      %1449 = vmatpush1.msra.mxu0 0.0
      %1450 = vmatprep.subr.mxu0 0.0
      %1451 = vmatpush1.msra.mxu0 0.0
      %1452 = vmatprep.subr.mxu0 0.0
      %1453 = vmatpush1.msra.mxu0 0.0
      %1454 = vmatprep.subr.mxu0 0.0
      %1455 = vmatpush1.msra.mxu0 0.0
      %1456 = vmatprep.subr.mxu0 0.0
      %1457 = vmatpush1.msra.mxu0 0.0
      %1458 = vmatprep.subr.mxu0 0.0
      %1459 = vmatpush1.msra.mxu0 0.0
      %1460 = vmatprep.subr.mxu0 0.0
      %1461 = vmatpush1.msra.mxu0 0.0
      %1462 = vmatprep.subr.mxu0 0.0
      %1463 = vmatpush1.msra.mxu0 0.0
      %1464 = vmatprep.subr.mxu0 0.0
      %1465 = vmatpush1.msra.mxu0 0.0
      %1466 = vmatprep.subr.mxu0 0.0
      %1467 = vmatpush1.msra.mxu0 0.0
      %1468 = vmatprep.subr.mxu0 0.0
      %1469 = vmatpush1.msra.mxu0 0.0
      %1470 = vmatprep.subr.mxu0 0.0
      %1471 = vmatpush1.msra.mxu0 0.0
      %1472 = vmatprep.subr.mxu0 0.0
      %1473 = vmatpush1.msra.mxu0 0.0
      %1474 = vmatprep.subr.mxu0 0.0
      %1475 = vmatpush1.msra.mxu0 0.0
      %1476 = vmatprep.subr.mxu0 0.0
      %1477 = vmatpush1.msra.mxu0 0.0
      %1478 = vmatprep.subr.mxu0 0.0
      %1479 = vmatpush1.msra.mxu0 0.0
      %1480 = vmatprep.subr.mxu0 0.0
      %1481 = vmatpush1.msra.mxu0 0.0
      %1482 = vmatprep.subr.mxu0 0.0
      %1483 = vmatpush1.msra.mxu0 0.0
      %1484 = vmatprep.subr.mxu0 0.0
      %1485 = vmatpush1.msra.mxu0 0.0
      %1486 = vmatprep.subr.mxu0 0.0
      %1487 = vmatpush1.msra.mxu0 0.0
      %1488 = vmatprep.subr.mxu0 0.0
      %1489 = vmatpush1.msra.mxu0 0.0
      %1490 = vmatprep.subr.mxu0 0.0
      %1491 = vmatpush1.msra.mxu0 0.0
      %1492 = vmatprep.mubr.f32.mxu0 0.0
      %1493 = vmatmul.mubr.f32.gmra.mrb[0].mxu0 %v1426
      %v1494 = vpop.f32.mrb[0].mxu0
      %v1495 = vadd.f32 0.0, %v1494
      %v1496 = vpop.f32.mrb[0].mxu0
      %1497 = vdwg.mxu0
      %1498 = vrot.lane.b32.xlu0 %v992, 112
      %v1499 = vpop.permute.xlu0 %1498
      %1500 = vrot.lane.b32.xlu0 %v1073, 112
      %v1501 = vpop.permute.xlu0 %1500
      %v1502 = vsel %vm1162, %v1499, 0
      %v1504 = vsel %vm1162, %v1501, 0
      %1506 = vmatprep.subr.mxu0 0.0
      %1507 = vmatpush1.xpose.msra.mxu0 %v1504
      %1508 = vmatprep.subr.mxu0 0.0
      %1509 = vmatpush1.xpose.msra.mxu0 0.0
      %1510 = vmatprep.subr.mxu0 0.0
      %1511 = vmatpush1.xpose.msra.mxu0 0.0
      %1512 = vmatprep.subr.mxu0 0.0
      %1513 = vmatpush1.xpose.msra.mxu0 0.0
      %1514 = vmatprep.subr.mxu0 0.0
      %1515 = vmatpush1.xpose.msra.mxu0 0.0
      %1516 = vmatprep.subr.mxu0 0.0
      %1517 = vmatpush1.xpose.msra.mxu0 0.0
      %1518 = vmatprep.subr.mxu0 0.0
      %1519 = vmatpush1.xpose.msra.mxu0 0.0
      %1520 = vmatprep.subr.mxu0 0.0
      %1521 = vmatpush1.xpose.msra.mxu0 0.0
      %1522 = vmatprep.subr.mxu0 0.0
      %1523 = vmatpush1.xpose.msra.mxu0 0.0
      %1524 = vmatprep.subr.mxu0 0.0
      %1525 = vmatpush1.xpose.msra.mxu0 0.0
      %1526 = vmatprep.subr.mxu0 0.0
      %1527 = vmatpush1.xpose.msra.mxu0 0.0
      %1528 = vmatprep.subr.mxu0 0.0
      %1529 = vmatpush1.xpose.msra.mxu0 0.0
      %1530 = vmatprep.subr.mxu0 0.0
      %1531 = vmatpush1.xpose.msra.mxu0 0.0
      %1532 = vmatprep.subr.mxu0 0.0
      %1533 = vmatpush1.xpose.msra.mxu0 0.0
      %1534 = vmatprep.subr.mxu0 0.0
      %1535 = vmatpush1.xpose.msra.mxu0 0.0
      %1536 = vmatprep.subr.mxu0 0.0
      %1537 = vmatpush1.xpose.msra.mxu0 0.0
      %1538 = vmatprep.subr.mxu0 0.0
      %1539 = vmatpush1.xpose.msra.mxu0 0.0
      %1540 = vmatprep.subr.mxu0 0.0
      %1541 = vmatpush1.xpose.msra.mxu0 0.0
      %1542 = vmatprep.subr.mxu0 0.0
      %1543 = vmatpush1.xpose.msra.mxu0 0.0
      %1544 = vmatprep.subr.mxu0 0.0
      %1545 = vmatpush1.xpose.msra.mxu0 0.0
      %1546 = vmatprep.subr.mxu0 0.0
      %1547 = vmatpush1.xpose.msra.mxu0 0.0
      %1548 = vmatprep.subr.mxu0 0.0
      %1549 = vmatpush1.xpose.msra.mxu0 0.0
      %1550 = vmatprep.subr.mxu0 0.0
      %1551 = vmatpush1.xpose.msra.mxu0 0.0
      %1552 = vmatprep.subr.mxu0 0.0
      %1553 = vmatpush1.xpose.msra.mxu0 0.0
      %1554 = vmatprep.subr.mxu0 0.0
      %1555 = vmatpush1.xpose.msra.mxu0 0.0
      %1556 = vmatprep.subr.mxu0 0.0
      %1557 = vmatpush1.xpose.msra.mxu0 0.0
      %1558 = vmatprep.subr.mxu0 0.0
      %1559 = vmatpush1.xpose.msra.mxu0 0.0
      %1560 = vmatprep.subr.mxu0 0.0
      %1561 = vmatpush1.xpose.msra.mxu0 0.0
      %1562 = vmatprep.subr.mxu0 0.0
      %1563 = vmatpush1.xpose.msra.mxu0 0.0
      %1564 = vmatprep.subr.mxu0 0.0
      %1565 = vmatpush1.xpose.msra.mxu0 0.0
      %1566 = vmatprep.subr.mxu0 0.0
      %1567 = vmatpush1.xpose.msra.mxu0 0.0
      %1568 = vmatprep.subr.mxu0 0.0
      %1569 = vmatpush1.xpose.msra.mxu0 0.0
      %1570 = vmatprep.mubr.f32.mxu0 0.0
      %1571 = vmatmul.mubr.f32.gmra.mrb[0].mxu0 %v1502
      %v1572 = vpop.f32.mrb[0].mxu0
      %v1573 = vadd.f32 0.0, %v1572
      %v1574 = vpop.f32.mrb[0].mxu0
      %1575 = vdwg.mxu0
      %1576 = vrot.lane.b32.xlu0 %v997, 112
      %v1577 = vpop.permute.xlu0 %1576
      %1578 = vrot.lane.b32.xlu0 %v1078, 112
      %v1579 = vpop.permute.xlu0 %1578
      %v1580 = vsel %vm1162, %v1577, 0
      %v1582 = vsel %vm1162, %v1579, 0
      %1584 = vmatprep.subr.mxu0 0.0
      %1585 = vmatpush1.xpose.msra.mxu0 %v1582
      %1586 = vmatprep.subr.mxu0 0.0
      %1587 = vmatpush1.xpose.msra.mxu0 0.0
      %1588 = vmatprep.subr.mxu0 0.0
      %1589 = vmatpush1.xpose.msra.mxu0 0.0
      %1590 = vmatprep.subr.mxu0 0.0
      %1591 = vmatpush1.xpose.msra.mxu0 0.0
      %1592 = vmatprep.subr.mxu0 0.0
      %1593 = vmatpush1.xpose.msra.mxu0 0.0
      %1594 = vmatprep.subr.mxu0 0.0
      %1595 = vmatpush1.xpose.msra.mxu0 0.0
      %1596 = vmatprep.subr.mxu0 0.0
      %1597 = vmatpush1.xpose.msra.mxu0 0.0
      %1598 = vmatprep.subr.mxu0 0.0
      %1599 = vmatpush1.xpose.msra.mxu0 0.0
      %1600 = vmatprep.subr.mxu0 0.0
      %1601 = vmatpush1.xpose.msra.mxu0 0.0
      %1602 = vmatprep.subr.mxu0 0.0
      %1603 = vmatpush1.xpose.msra.mxu0 0.0
      %1604 = vmatprep.subr.mxu0 0.0
      %1605 = vmatpush1.xpose.msra.mxu0 0.0
      %1606 = vmatprep.subr.mxu0 0.0
      %1607 = vmatpush1.xpose.msra.mxu0 0.0
      %1608 = vmatprep.subr.mxu0 0.0
      %1609 = vmatpush1.xpose.msra.mxu0 0.0
      %1610 = vmatprep.subr.mxu0 0.0
      %1611 = vmatpush1.xpose.msra.mxu0 0.0
      %1612 = vmatprep.subr.mxu0 0.0
      %1613 = vmatpush1.xpose.msra.mxu0 0.0
      %1614 = vmatprep.subr.mxu0 0.0
      %1615 = vmatpush1.xpose.msra.mxu0 0.0
      %1616 = vmatprep.subr.mxu0 0.0
      %1617 = vmatpush1.xpose.msra.mxu0 0.0
      %1618 = vmatprep.subr.mxu0 0.0
      %1619 = vmatpush1.xpose.msra.mxu0 0.0
      %1620 = vmatprep.subr.mxu0 0.0
      %1621 = vmatpush1.xpose.msra.mxu0 0.0
      %1622 = vmatprep.subr.mxu0 0.0
      %1623 = vmatpush1.xpose.msra.mxu0 0.0
      %1624 = vmatprep.subr.mxu0 0.0
      %1625 = vmatpush1.xpose.msra.mxu0 0.0
      %1626 = vmatprep.subr.mxu0 0.0
      %1627 = vmatpush1.xpose.msra.mxu0 0.0
      %1628 = vmatprep.subr.mxu0 0.0
      %1629 = vmatpush1.xpose.msra.mxu0 0.0
      %1630 = vmatprep.subr.mxu0 0.0
      %1631 = vmatpush1.xpose.msra.mxu0 0.0
      %1632 = vmatprep.subr.mxu0 0.0
      %1633 = vmatpush1.xpose.msra.mxu0 0.0
      %1634 = vmatprep.subr.mxu0 0.0
      %1635 = vmatpush1.xpose.msra.mxu0 0.0
      %1636 = vmatprep.subr.mxu0 0.0
      %1637 = vmatpush1.xpose.msra.mxu0 0.0
      %1638 = vmatprep.subr.mxu0 0.0
      %1639 = vmatpush1.xpose.msra.mxu0 0.0
      %1640 = vmatprep.subr.mxu0 0.0
      %1641 = vmatpush1.xpose.msra.mxu0 0.0
      %1642 = vmatprep.subr.mxu0 0.0
      %1643 = vmatpush1.xpose.msra.mxu0 0.0
      %1644 = vmatprep.subr.mxu0 0.0
      %1645 = vmatpush1.xpose.msra.mxu0 0.0
      %1646 = vmatprep.subr.mxu0 0.0
      %1647 = vmatpush1.xpose.msra.mxu0 0.0
      %1648 = vmatprep.mubr.f32.mxu0 0.0
      %1649 = vmatmul.mubr.f32.gmra.mrb[0].mxu0 %v1580
      %v1650 = vpop.f32.mrb[0].mxu0
      %v1651 = vadd.f32 0.0, %v1650
      %v1652 = vpop.f32.mrb[0].mxu0
      %1653 = vdwg.mxu0
      %v1654 = vmul.f32 %v1573, 0.25
      %v1655 = vmul.f32 %v1651, 0.25
      %v1656 = vadd.f32 %v1654, %v1320
      %v1657 = vadd.f32 %v1655, %v1324
      %v1658 = vsel %vm1329, %v1656, -inf
      %1659 = vmax.xlane.f32.xlu0 %v1658
      %v1660 = vpop.xlane.xlu0 %1659
      %v1661 = vsel %vm1329, %v1657, -inf
      %1662 = vmax.xlane.f32.xlu0 %v1661
      %v1663 = vpop.xlane.xlu0 %1662
      %v1664 = vsub.f32 %v1656, %v1660
      %v1665 = vsub.f32 %v1657, %v1663
      %v1666 = vmul.f32 %v1664, 1.442695
      %v1667 = vpow.pop %v1666
      %v1668 = vmul.f32 %v1665, 1.442695
      %v1669 = vpow.pop %v1668
      %v1670 = vsel %vm1329, %v1667, 0.0
      %1671 = vadd.xlane.f32.xlu0 %v1670
      %v1672 = vpop.xlane.xlu0 %1671
      %v1673 = vsel %vm1329, %v1669, 0.0
      %1674 = vadd.xlane.f32.xlu0 %v1673
      %v1675 = vpop.xlane.xlu0 %1674
      %v1676 = vrcp.pop %v1672
      %v1677 = vrcp.pop %v1675
      %v1678 = vmul.f32 %v1667, %v1676
      %v1679 = vmul.f32 %v1669, %v1677
      %1681 = vrot.lane.b32.xlu0 %v1154, 112
      %v1682 = vpop.permute.xlu0 %1681
      %v1685 = vsel %vm1329, %v1678, 0
      %1687 = vmatprep.subr.mxu0 0.0
      %1688 = vmatpush1.msra.mxu0 %v1682
      %1689 = vmatprep.subr.mxu0 0.0
      %1690 = vmatpush1.msra.mxu0 0.0
      %1691 = vmatprep.subr.mxu0 0.0
      %1692 = vmatpush1.msra.mxu0 0.0
      %1693 = vmatprep.subr.mxu0 0.0
      %1694 = vmatpush1.msra.mxu0 0.0
      %1695 = vmatprep.subr.mxu0 0.0
      %1696 = vmatpush1.msra.mxu0 0.0
      %1697 = vmatprep.subr.mxu0 0.0
      %1698 = vmatpush1.msra.mxu0 0.0
      %1699 = vmatprep.subr.mxu0 0.0
      %1700 = vmatpush1.msra.mxu0 0.0
      %1701 = vmatprep.subr.mxu0 0.0
      %1702 = vmatpush1.msra.mxu0 0.0
      %1703 = vmatprep.subr.mxu0 0.0
      %1704 = vmatpush1.msra.mxu0 0.0
      %1705 = vmatprep.subr.mxu0 0.0
      %1706 = vmatpush1.msra.mxu0 0.0
      %1707 = vmatprep.subr.mxu0 0.0
      %1708 = vmatpush1.msra.mxu0 0.0
      %1709 = vmatprep.subr.mxu0 0.0
      %1710 = vmatpush1.msra.mxu0 0.0
      %1711 = vmatprep.subr.mxu0 0.0
      %1712 = vmatpush1.msra.mxu0 0.0
      %1713 = vmatprep.subr.mxu0 0.0
      %1714 = vmatpush1.msra.mxu0 0.0
      %1715 = vmatprep.subr.mxu0 0.0
      %1716 = vmatpush1.msra.mxu0 0.0
      %1717 = vmatprep.subr.mxu0 0.0
      %1718 = vmatpush1.msra.mxu0 0.0
      %1719 = vmatprep.subr.mxu0 0.0
      %1720 = vmatpush1.msra.mxu0 0.0
      %1721 = vmatprep.subr.mxu0 0.0
      %1722 = vmatpush1.msra.mxu0 0.0
      %1723 = vmatprep.subr.mxu0 0.0
      %1724 = vmatpush1.msra.mxu0 0.0
      %1725 = vmatprep.subr.mxu0 0.0
      %1726 = vmatpush1.msra.mxu0 0.0
      %1727 = vmatprep.subr.mxu0 0.0
      %1728 = vmatpush1.msra.mxu0 0.0
      %1729 = vmatprep.subr.mxu0 0.0
      %1730 = vmatpush1.msra.mxu0 0.0
      %1731 = vmatprep.subr.mxu0 0.0
      %1732 = vmatpush1.msra.mxu0 0.0
      %1733 = vmatprep.subr.mxu0 0.0
      %1734 = vmatpush1.msra.mxu0 0.0
      %1735 = vmatprep.subr.mxu0 0.0
      %1736 = vmatpush1.msra.mxu0 0.0
      %1737 = vmatprep.subr.mxu0 0.0
      %1738 = vmatpush1.msra.mxu0 0.0
      %1739 = vmatprep.subr.mxu0 0.0
      %1740 = vmatpush1.msra.mxu0 0.0
      %1741 = vmatprep.subr.mxu0 0.0
      %1742 = vmatpush1.msra.mxu0 0.0
      %1743 = vmatprep.subr.mxu0 0.0
      %1744 = vmatpush1.msra.mxu0 0.0
      %1745 = vmatprep.subr.mxu0 0.0
      %1746 = vmatpush1.msra.mxu0 0.0
      %1747 = vmatprep.subr.mxu0 0.0
      %1748 = vmatpush1.msra.mxu0 0.0
      %1749 = vmatprep.subr.mxu0 0.0
      %1750 = vmatpush1.msra.mxu0 0.0
      %1751 = vmatprep.mubr.f32.mxu0 0.0
      %1752 = vmatmul.mubr.f32.gmra.mrb[0].mxu0 %v1685
      %v1753 = vpop.f32.mrb[0].mxu0
      %v1754 = vadd.f32 0.0, %v1753
      %v1755 = vpop.f32.mrb[0].mxu0
      %1756 = vdwg.mxu0
      %1758 = vrot.lane.b32.xlu0 %v1159, 112
      %v1759 = vpop.permute.xlu0 %1758
      %v1762 = vsel %vm1329, %v1679, 0
      %1764 = vmatprep.subr.mxu0 0.0
      %1765 = vmatpush1.msra.mxu0 %v1759
      %1766 = vmatprep.subr.mxu0 0.0
      %1767 = vmatpush1.msra.mxu0 0.0
      %1768 = vmatprep.subr.mxu0 0.0
      %1769 = vmatpush1.msra.mxu0 0.0
      %1770 = vmatprep.subr.mxu0 0.0
      %1771 = vmatpush1.msra.mxu0 0.0
      %1772 = vmatprep.subr.mxu0 0.0
      %1773 = vmatpush1.msra.mxu0 0.0
      %1774 = vmatprep.subr.mxu0 0.0
      %1775 = vmatpush1.msra.mxu0 0.0
      %1776 = vmatprep.subr.mxu0 0.0
      %1777 = vmatpush1.msra.mxu0 0.0
      %1778 = vmatprep.subr.mxu0 0.0
      %1779 = vmatpush1.msra.mxu0 0.0
      %1780 = vmatprep.subr.mxu0 0.0
      %1781 = vmatpush1.msra.mxu0 0.0
      %1782 = vmatprep.subr.mxu0 0.0
      %1783 = vmatpush1.msra.mxu0 0.0
      %1784 = vmatprep.subr.mxu0 0.0
      %1785 = vmatpush1.msra.mxu0 0.0
      %1786 = vmatprep.subr.mxu0 0.0
      %1787 = vmatpush1.msra.mxu0 0.0
      %1788 = vmatprep.subr.mxu0 0.0
      %1789 = vmatpush1.msra.mxu0 0.0
      %1790 = vmatprep.subr.mxu0 0.0
      %1791 = vmatpush1.msra.mxu0 0.0
      %1792 = vmatprep.subr.mxu0 0.0
      %1793 = vmatpush1.msra.mxu0 0.0
      %1794 = vmatprep.subr.mxu0 0.0
      %1795 = vmatpush1.msra.mxu0 0.0
      %1796 = vmatprep.subr.mxu0 0.0
      %1797 = vmatpush1.msra.mxu0 0.0
      %1798 = vmatprep.subr.mxu0 0.0
      %1799 = vmatpush1.msra.mxu0 0.0
      %1800 = vmatprep.subr.mxu0 0.0
      %1801 = vmatpush1.msra.mxu0 0.0
      %1802 = vmatprep.subr.mxu0 0.0
      %1803 = vmatpush1.msra.mxu0 0.0
      %1804 = vmatprep.subr.mxu0 0.0
      %1805 = vmatpush1.msra.mxu0 0.0
      %1806 = vmatprep.subr.mxu0 0.0
      %1807 = vmatpush1.msra.mxu0 0.0
      %1808 = vmatprep.subr.mxu0 0.0
      %1809 = vmatpush1.msra.mxu0 0.0
      %1810 = vmatprep.subr.mxu0 0.0
      %1811 = vmatpush1.msra.mxu0 0.0
      %1812 = vmatprep.subr.mxu0 0.0
      %1813 = vmatpush1.msra.mxu0 0.0
      %1814 = vmatprep.subr.mxu0 0.0
      %1815 = vmatpush1.msra.mxu0 0.0
      %1816 = vmatprep.subr.mxu0 0.0
      %1817 = vmatpush1.msra.mxu0 0.0
      %1818 = vmatprep.subr.mxu0 0.0
      %1819 = vmatpush1.msra.mxu0 0.0
      %1820 = vmatprep.subr.mxu0 0.0
      %1821 = vmatpush1.msra.mxu0 0.0
      %1822 = vmatprep.subr.mxu0 0.0
      %1823 = vmatpush1.msra.mxu0 0.0
      %1824 = vmatprep.subr.mxu0 0.0
      %1825 = vmatpush1.msra.mxu0 0.0
      %1826 = vmatprep.subr.mxu0 0.0
      %1827 = vmatpush1.msra.mxu0 0.0
      %1828 = vmatprep.mubr.f32.mxu0 0.0
      %1829 = vmatmul.mubr.f32.gmra.mrb[0].mxu0 %v1762
      %v1830 = vpop.f32.mrb[0].mxu0
      %v1831 = vadd.f32 0.0, %v1830
      %v1832 = vpop.f32.mrb[0].mxu0
      %1833 = vdwg.mxu0
      %1836 = vrot.lane.b32.xlu0 %v1754, 16
      %v1837 = vpop.permute.xlu0 %1836
      %1838 = vrot.lane.b32.xlu0 %v1831, 16
      %v1839 = vpop.permute.xlu0 %1838
      %v1842 = vsel %vm1162, %v1422, %v1837
      %v1843 = vsel %vm1162, %v1495, %v1839
      %v1845 = vlaneseq
      %v1846 = vshrl.u32 %v1845, 7
      %v1847 = vsub.s32 0, %v1846
      %v1848 = vrot.slane %v911, %v1847
      %v1851 = vsel %vm918, %v1842, 0
      %v1854 = vsel %vm918, %v1843, 0
      %1856 = vmatprep.subr.mxu0 0.0
      %1857 = vmatpush1.msra.mxu0 %v907
      %1858 = vmatprep.subr.mxu0 0.0
      %1859 = vmatpush1.msra.mxu0 %v908
      %1860 = vmatprep.subr.mxu0 0.0
      %1861 = vmatpush1.msra.mxu0 %v909
      %1862 = vmatprep.subr.mxu0 0.0
      %1863 = vmatpush1.msra.mxu0 %v910
      %1864 = vmatprep.subr.mxu0 0.0
      %1865 = vmatpush1.msra.mxu0 0.0
      %1866 = vmatprep.subr.mxu0 0.0
      %1867 = vmatpush1.msra.mxu0 0.0
      %1868 = vmatprep.subr.mxu0 0.0
      %1869 = vmatpush1.msra.mxu0 0.0
      %1870 = vmatprep.subr.mxu0 0.0
      %1871 = vmatpush1.msra.mxu0 0.0
      %1872 = vmatprep.subr.mxu0 0.0
      %1873 = vmatpush1.msra.mxu0 0.0
      %1874 = vmatprep.subr.mxu0 0.0
      %1875 = vmatpush1.msra.mxu0 0.0
      %1876 = vmatprep.subr.mxu0 0.0
      %1877 = vmatpush1.msra.mxu0 0.0
      %1878 = vmatprep.subr.mxu0 0.0
      %1879 = vmatpush1.msra.mxu0 0.0
      %1880 = vmatprep.subr.mxu0 0.0
      %1881 = vmatpush1.msra.mxu0 0.0
      %1882 = vmatprep.subr.mxu0 0.0
      %1883 = vmatpush1.msra.mxu0 0.0
      %1884 = vmatprep.subr.mxu0 0.0
      %1885 = vmatpush1.msra.mxu0 0.0
      %1886 = vmatprep.subr.mxu0 0.0
      %1887 = vmatpush1.msra.mxu0 0.0
      %1888 = vmatprep.subr.mxu0 0.0
      %1889 = vmatpush1.msra.mxu0 0.0
      %1890 = vmatprep.subr.mxu0 0.0
      %1891 = vmatpush1.msra.mxu0 0.0
      %1892 = vmatprep.subr.mxu0 0.0
      %1893 = vmatpush1.msra.mxu0 0.0
      %1894 = vmatprep.subr.mxu0 0.0
      %1895 = vmatpush1.msra.mxu0 0.0
      %1896 = vmatprep.subr.mxu0 0.0
      %1897 = vmatpush1.msra.mxu0 0.0
      %1898 = vmatprep.subr.mxu0 0.0
      %1899 = vmatpush1.msra.mxu0 0.0
      %1900 = vmatprep.subr.mxu0 0.0
      %1901 = vmatpush1.msra.mxu0 0.0
      %1902 = vmatprep.subr.mxu0 0.0
      %1903 = vmatpush1.msra.mxu0 0.0
      %1904 = vmatprep.subr.mxu0 0.0
      %1905 = vmatpush1.msra.mxu0 0.0
      %1906 = vmatprep.subr.mxu0 0.0
      %1907 = vmatpush1.msra.mxu0 0.0
      %1908 = vmatprep.subr.mxu0 0.0
      %1909 = vmatpush1.msra.mxu0 0.0
      %1910 = vmatprep.subr.mxu0 0.0
      %1911 = vmatpush1.msra.mxu0 0.0
      %1912 = vmatprep.subr.mxu0 0.0
      %1913 = vmatpush1.msra.mxu0 0.0
      %1914 = vmatprep.subr.mxu0 0.0
      %1915 = vmatpush1.msra.mxu0 0.0
      %1916 = vmatprep.subr.mxu0 0.0
      %1917 = vmatpush1.msra.mxu0 0.0
      %1918 = vmatprep.subr.mxu0 0.0
      %1919 = vmatpush1.msra.mxu0 0.0
      %1920 = vmatprep.mubr.f32.mxu0 0.0
      %1921 = vmatmul.mubr.f32.gmra.mrb[0].mxu0 %v1851
      %v1922 = vpop.f32.mrb[0].mxu0
      %v1923 = vadd.f32 %v1848, %v1922
      %v1924 = vpop.f32.mrb[0].mxu0
      %1925 = vmatprep.mubr.f32.mxu0 0.0
      %1926 = vmatmul.mubr.f32.gmra.mrb[0].mxu0 %v1854
      %v1927 = vpop.f32.mrb[0].mxu0
      %v1928 = vadd.f32 %v1848, %v1927
      %v1929 = vpop.f32.mrb[0].mxu0
      %1930 = vdwg.mxu0
      %v1931 = vadd.f32 %v866, %v1923
      %v1932 = vadd.f32 %v867, %v1928
      %v1933 = vld [vmem:[%s831] sm:$0x1]
      %v1934 = vld [vmem:[%s834] sm:$0x1]
      %v1935 = vsel %vm918, %v1931, 0.0
      %1936 = vadd.xlane.f32.xlu0 %v1935
      %v1937 = vpop.xlane.xlu0 %1936
      %v1938 = vsel %vm918, %v1932, 0.0
      %1939 = vadd.xlane.f32.xlu0 %v1938
      %v1940 = vpop.xlane.xlu0 %1939
      %v1941 = vrcp.pop 32.0
      %v1942 = vmul.f32 %v1937, %v1941
      %v1943 = vmul.f32 %v1940, %v1941
      %v1944 = vsub.f32 %v1931, %v1942
      %v1945 = vsub.f32 %v1932, %v1943
      %v1946 = vmul.f32 %v1944, %v1944
      %v1947 = vmul.f32 %v1945, %v1945
      %v1948 = vsel %vm918, %v1946, 0.0
      %1949 = vadd.xlane.f32.xlu0 %v1948
      %v1950 = vpop.xlane.xlu0 %1949
      %v1951 = vsel %vm918, %v1947, 0.0
      %1952 = vadd.xlane.f32.xlu0 %v1951
      %v1953 = vpop.xlane.xlu0 %1952
      %v1954 = vmul.f32 %v1950, %v1941
      %v1955 = vmul.f32 %v1953, %v1941
      %v1956 = vadd.f32 %v1954, 1e-12
      %v1957 = vadd.f32 %v1955, 1e-12
      %v1958 = vrsqrt.pop %v1956
      %v1959 = vrsqrt.pop %v1957
      %v1960 = vmul.f32 %v1944, %v1958
      %v1961 = vmul.f32 %v1945, %v1959
      %v1963 = vlaneseq
      %v1964 = vshrl.u32 %v1963, 7
      %v1965 = vsub.s32 0, %v1964
      %v1966 = vrot.slane %v1933, %v1965
      %v1968 = vmul.f32 %v1960, %v1966
      %v1969 = vmul.f32 %v1961, %v1966
      %v1971 = vlaneseq
      %v1972 = vshrl.u32 %v1971, 7
      %v1973 = vsub.s32 0, %v1972
      %v1974 = vrot.slane %v1934, %v1973
      %v1976 = vadd.f32 %v1968, %v1974
      %v1977 = vadd.f32 %v1969, %v1974
      %v1978 = vld [vmem:[%s839] sm:$0xff]
      %v1979 = vld [vmem:[%s839 + $0x8] sm:$0xff]
      %v1980 = vld [vmem:[%s839 + $0x10] sm:$0xff]
      %v1981 = vld [vmem:[%s839 + $0x18] sm:$0xff]
      %v1982 = vld [vmem:[%s842] sm:$0x1]
      %v1984 = vlaneseq
      %v1985 = vshrl.u32 %v1984, 7
      %v1986 = vsub.s32 0, %v1985
      %v1987 = vrot.slane %v1982, %v1986
      %v1990 = vsel %vm918, %v1976, 0
      %v1993 = vsel %vm918, %v1977, 0
      %1995 = vmatprep.subr.mxu0 0.0
      %1996 = vmatpush1.msra.mxu0 %v1978
      %1997 = vmatprep.subr.mxu0 0.0
      %1998 = vmatpush1.msra.mxu0 %v1979
      %1999 = vmatprep.subr.mxu0 0.0
      %2000 = vmatpush1.msra.mxu0 %v1980
      %2001 = vmatprep.subr.mxu0 0.0
      %2002 = vmatpush1.msra.mxu0 %v1981
      %2003 = vmatprep.subr.mxu0 0.0
      %2004 = vmatpush1.msra.mxu0 0.0
      %2005 = vmatprep.subr.mxu0 0.0
      %2006 = vmatpush1.msra.mxu0 0.0
      %2007 = vmatprep.subr.mxu0 0.0
      %2008 = vmatpush1.msra.mxu0 0.0
      %2009 = vmatprep.subr.mxu0 0.0
      %2010 = vmatpush1.msra.mxu0 0.0
      %2011 = vmatprep.subr.mxu0 0.0
      %2012 = vmatpush1.msra.mxu0 0.0
      %2013 = vmatprep.subr.mxu0 0.0
      %2014 = vmatpush1.msra.mxu0 0.0
      %2015 = vmatprep.subr.mxu0 0.0
      %2016 = vmatpush1.msra.mxu0 0.0
      %2017 = vmatprep.subr.mxu0 0.0
      %2018 = vmatpush1.msra.mxu0 0.0
      %2019 = vmatprep.subr.mxu0 0.0
      %2020 = vmatpush1.msra.mxu0 0.0
      %2021 = vmatprep.subr.mxu0 0.0
      %2022 = vmatpush1.msra.mxu0 0.0
      %2023 = vmatprep.subr.mxu0 0.0
      %2024 = vmatpush1.msra.mxu0 0.0
      %2025 = vmatprep.subr.mxu0 0.0
      %2026 = vmatpush1.msra.mxu0 0.0
      %2027 = vmatprep.subr.mxu0 0.0
      %2028 = vmatpush1.msra.mxu0 0.0
      %2029 = vmatprep.subr.mxu0 0.0
      %2030 = vmatpush1.msra.mxu0 0.0
      %2031 = vmatprep.subr.mxu0 0.0
      %2032 = vmatpush1.msra.mxu0 0.0
      %2033 = vmatprep.subr.mxu0 0.0
      %2034 = vmatpush1.msra.mxu0 0.0
      %2035 = vmatprep.subr.mxu0 0.0
      %2036 = vmatpush1.msra.mxu0 0.0
      %2037 = vmatprep.subr.mxu0 0.0
      %2038 = vmatpush1.msra.mxu0 0.0
      %2039 = vmatprep.subr.mxu0 0.0
      %2040 = vmatpush1.msra.mxu0 0.0
      %2041 = vmatprep.subr.mxu0 0.0
      %2042 = vmatpush1.msra.mxu0 0.0
      %2043 = vmatprep.subr.mxu0 0.0
      %2044 = vmatpush1.msra.mxu0 0.0
      %2045 = vmatprep.subr.mxu0 0.0
      %2046 = vmatpush1.msra.mxu0 0.0
      %2047 = vmatprep.subr.mxu0 0.0
      %2048 = vmatpush1.msra.mxu0 0.0
      %2049 = vmatprep.subr.mxu0 0.0
      %2050 = vmatpush1.msra.mxu0 0.0
      %2051 = vmatprep.subr.mxu0 0.0
      %2052 = vmatpush1.msra.mxu0 0.0
      %2053 = vmatprep.subr.mxu0 0.0
      %2054 = vmatpush1.msra.mxu0 0.0
      %2055 = vmatprep.subr.mxu0 0.0
      %2056 = vmatpush1.msra.mxu0 0.0
      %2057 = vmatprep.subr.mxu0 0.0
      %2058 = vmatpush1.msra.mxu0 0.0
      %2059 = vmatprep.mubr.f32.mxu0 0.0
      %2060 = vmatmul.mubr.f32.gmra.mrb[0].mxu0 %v1990
      %v2061 = vpop.f32.mrb[0].mxu0
      %v2062 = vadd.f32 %v1987, %v2061
      %v2063 = vpop.f32.mrb[0].mxu0
      %2064 = vmatprep.mubr.f32.mxu0 0.0
      %2065 = vmatmul.mubr.f32.gmra.mrb[0].mxu0 %v1993
      %v2066 = vpop.f32.mrb[0].mxu0
      %v2067 = vadd.f32 %v1987, %v2066
      %v2068 = vpop.f32.mrb[0].mxu0
      %2069 = vdwg.mxu0
      %v2070 = vmul.f32 %v2062, %v2062
      %v2071 = vmul.f32 %v2067, %v2067
      %v2072 = vmul.f32 %v2062, %v2070
      %v2073 = vmul.f32 %v2067, %v2071
      %v2074 = vmul.f32 %v2072, 0.044715
      %v2075 = vmul.f32 %v2073, 0.044715
      %v2076 = vadd.f32 %v2062, %v2074
      %v2077 = vadd.f32 %v2067, %v2075
      %v2078 = vmul.f32 %v2076, 0.7978846
      %v2079 = vmul.f32 %v2077, 0.7978846
      %v2080 = vtanh.pop %v2078
      %v2081 = vtanh.pop %v2079
      %v2082 = vadd.f32 %v2080, 1.0
      %v2083 = vadd.f32 %v2081, 1.0
      %v2084 = vmul.f32 %v2082, 0.5
      %v2085 = vmul.f32 %v2083, 0.5
      %v2086 = vmul.f32 %v2062, %v2084
      %v2087 = vmul.f32 %v2067, %v2085
      %v2088 = vld [vmem:[%s847] sm:$0xff]
      %v2089 = vld [vmem:[%s847 + $0x8] sm:$0xff]
      %v2090 = vld [vmem:[%s847 + $0x10] sm:$0xff]
      %v2091 = vld [vmem:[%s847 + $0x18] sm:$0xff]
      %v2092 = vld [vmem:[%s847 + $0x20] sm:$0xff]
      %v2093 = vld [vmem:[%s847 + $0x28] sm:$0xff]
      %v2094 = vld [vmem:[%s847 + $0x30] sm:$0xff]
      %v2095 = vld [vmem:[%s847 + $0x38] sm:$0xff]
      %v2096 = vld [vmem:[%s850] sm:$0x1]
      %v2098 = vlaneseq
      %v2099 = vshrl.u32 %v2098, 7
      %v2100 = vsub.s32 0, %v2099
      %v2101 = vrot.slane %v2096, %v2100
      %vm2103 = vcmask 523264
      %v2105 = vsel %vm2103, %v2086, 0
      %v2108 = vsel %vm2103, %v2087, 0
      %2110 = vmatprep.subr.mxu0 0.0
      %2111 = vmatpush1.msra.mxu0 %v2088
      %2112 = vmatprep.subr.mxu0 0.0
      %2113 = vmatpush1.msra.mxu0 %v2089
      %2114 = vmatprep.subr.mxu0 0.0
      %2115 = vmatpush1.msra.mxu0 %v2090
      %2116 = vmatprep.subr.mxu0 0.0
      %2117 = vmatpush1.msra.mxu0 %v2091
      %2118 = vmatprep.subr.mxu0 0.0
      %2119 = vmatpush1.msra.mxu0 %v2092
      %2120 = vmatprep.subr.mxu0 0.0
      %2121 = vmatpush1.msra.mxu0 %v2093
      %2122 = vmatprep.subr.mxu0 0.0
      %2123 = vmatpush1.msra.mxu0 %v2094
      %2124 = vmatprep.subr.mxu0 0.0
      %2125 = vmatpush1.msra.mxu0 %v2095
      %2126 = vmatprep.subr.mxu0 0.0
      %2127 = vmatpush1.msra.mxu0 0.0
      %2128 = vmatprep.subr.mxu0 0.0
      %2129 = vmatpush1.msra.mxu0 0.0
      %2130 = vmatprep.subr.mxu0 0.0
      %2131 = vmatpush1.msra.mxu0 0.0
      %2132 = vmatprep.subr.mxu0 0.0
      %2133 = vmatpush1.msra.mxu0 0.0
      %2134 = vmatprep.subr.mxu0 0.0
      %2135 = vmatpush1.msra.mxu0 0.0
      %2136 = vmatprep.subr.mxu0 0.0
      %2137 = vmatpush1.msra.mxu0 0.0
      %2138 = vmatprep.subr.mxu0 0.0
      %2139 = vmatpush1.msra.mxu0 0.0
      %2140 = vmatprep.subr.mxu0 0.0
      %2141 = vmatpush1.msra.mxu0 0.0
      %2142 = vmatprep.subr.mxu0 0.0
      %2143 = vmatpush1.msra.mxu0 0.0
      %2144 = vmatprep.subr.mxu0 0.0
      %2145 = vmatpush1.msra.mxu0 0.0
      %2146 = vmatprep.subr.mxu0 0.0
      %2147 = vmatpush1.msra.mxu0 0.0
      %2148 = vmatprep.subr.mxu0 0.0
      %2149 = vmatpush1.msra.mxu0 0.0
      %2150 = vmatprep.subr.mxu0 0.0
      %2151 = vmatpush1.msra.mxu0 0.0
      %2152 = vmatprep.subr.mxu0 0.0
      %2153 = vmatpush1.msra.mxu0 0.0
      %2154 = vmatprep.subr.mxu0 0.0
      %2155 = vmatpush1.msra.mxu0 0.0
      %2156 = vmatprep.subr.mxu0 0.0
      %2157 = vmatpush1.msra.mxu0 0.0
      %2158 = vmatprep.subr.mxu0 0.0
      %2159 = vmatpush1.msra.mxu0 0.0
      %2160 = vmatprep.subr.mxu0 0.0
      %2161 = vmatpush1.msra.mxu0 0.0
      %2162 = vmatprep.subr.mxu0 0.0
      %2163 = vmatpush1.msra.mxu0 0.0
      %2164 = vmatprep.subr.mxu0 0.0
      %2165 = vmatpush1.msra.mxu0 0.0
      %2166 = vmatprep.subr.mxu0 0.0
      %2167 = vmatpush1.msra.mxu0 0.0
      %2168 = vmatprep.subr.mxu0 0.0
      %2169 = vmatpush1.msra.mxu0 0.0
      %2170 = vmatprep.subr.mxu0 0.0
      %2171 = vmatpush1.msra.mxu0 0.0
      %2172 = vmatprep.subr.mxu0 0.0
      %2173 = vmatpush1.msra.mxu0 0.0
      %2174 = vmatprep.mubr.f32.mxu0 0.0
      %2175 = vmatmul.mubr.f32.gmra.mrb[0].mxu0 %v2105
      %v2176 = vpop.f32.mrb[0].mxu0
      %v2177 = vadd.f32 %v2101, %v2176
      %v2178 = vpop.f32.mrb[0].mxu0
      %2179 = vmatprep.mubr.f32.mxu0 0.0
      %2180 = vmatmul.mubr.f32.gmra.mrb[0].mxu0 %v2108
      %v2181 = vpop.f32.mrb[0].mxu0
      %v2182 = vadd.f32 %v2101, %v2181
      %v2183 = vpop.f32.mrb[0].mxu0
      %2184 = vdwg.mxu0
      %v2185 = vadd.f32 %v1976, %v2177
      %v2186 = vadd.f32 %v1977, %v2182
      %v2187 = vld [vmem:[%s853] sm:$0x1]
      %v2188 = vld [vmem:[%s856] sm:$0x1]
      %v2189 = vsel %vm918, %v2185, 0.0
      %2190 = vadd.xlane.f32.xlu0 %v2189
      %v2191 = vpop.xlane.xlu0 %2190
      %v2192 = vsel %vm918, %v2186, 0.0
      %2193 = vadd.xlane.f32.xlu0 %v2192
      %v2194 = vpop.xlane.xlu0 %2193
      %v2195 = vmul.f32 %v2191, %v1941
      %v2196 = vmul.f32 %v2194, %v1941
      %v2197 = vsub.f32 %v2185, %v2195
      %v2198 = vsub.f32 %v2186, %v2196
      %v2199 = vmul.f32 %v2197, %v2197
      %v2200 = vmul.f32 %v2198, %v2198
      %v2201 = vsel %vm918, %v2199, 0.0
      %2202 = vadd.xlane.f32.xlu0 %v2201
      %v2203 = vpop.xlane.xlu0 %2202
      %v2204 = vsel %vm918, %v2200, 0.0
      %2205 = vadd.xlane.f32.xlu0 %v2204
      %v2206 = vpop.xlane.xlu0 %2205
      %v2207 = vmul.f32 %v2203, %v1941
      %v2208 = vmul.f32 %v2206, %v1941
      %v2209 = vadd.f32 %v2207, 1e-12
      %v2210 = vadd.f32 %v2208, 1e-12
      %v2211 = vrsqrt.pop %v2209
      %v2212 = vrsqrt.pop %v2210
      %v2213 = vmul.f32 %v2197, %v2211
      %v2214 = vmul.f32 %v2198, %v2212
      %v2216 = vlaneseq
      %v2217 = vshrl.u32 %v2216, 7
      %v2218 = vsub.s32 0, %v2217
      %v2219 = vrot.slane %v2187, %v2218
      %v2221 = vmul.f32 %v2213, %v2219
      %v2222 = vmul.f32 %v2214, %v2219
      %v2224 = vlaneseq
      %v2225 = vshrl.u32 %v2224, 7
      %v2226 = vsub.s32 0, %v2225
      %v2227 = vrot.slane %v2188, %v2226
      %v2229 = vadd.f32 %v2221, %v2227
      %v2230 = vadd.f32 %v2222, %v2227
      %2231 = vst.msk [vmem:[#allocation2] sm:$0xff] %vm918, %v2229
      %2232 = vst.msk [vmem:[#allocation2 + $0x8] sm:$0xff] %vm918, %v2230
      %p2233 = scmp.eq.s32.totalorder %s33, 1
      // Predicated region
      $region105: #{reranker_regressor_forward.1} parent=99 // pred_check
        %p2234 = pneg %p2233
      $region106: #{reranker_regressor_forward.1} parent=99 // pred_check_branch
        %2236 = sbr.rel (%p2234) target = $region108
      $region107: #{reranker_regressor_forward.1} parent=99 // pred_region
        %v2237 = vld [vmem:[%s18] sm:$0x1]
        %v2239 = vlaneseq
        %v2240 = vshrl.u32 %v2239, 7
        %v2241 = vsub.s32 0, %v2240
        %v2242 = vrot.slane %v2237, %v2241
        %v2244 = vmul.f32 %v2229, %v2242
        %v2245 = vmul.f32 %v2230, %v2242
        %v2248 = vrot.slane %v2245, 7
        %vm2249 = vcmask 1041409
        %v2250 = vsel %vm2249, %v2248, %v2244
        %vm2252 = vcmask 254976
        %v2253 = vsel %vm2252, %v2250, 0.0
        %2254 = vadd.xlane.f32.xlu0 %v2253
        %v2255 = vpop.xlane.xlu0 %2254
        %v2256 = vld [vmem:[#allocation3] sm:$0x1]
        %v2258 = vlaneseq
        %v2259 = vshrl.u32 %v2258, 7
        %v2260 = vsub.s32 0, %v2259
        %v2261 = vrot.slane %v2256, %v2260
        %v2263 = vadd.f32 %v2255, %v2261
        %v2264 = vsub.f32 0.0, %v2263
        %v2265 = vmul.f32 %v2264, 1.442695
        %v2266 = vpow.pop %v2265
        %v2267 = vadd.f32 %v2266, 1.0
        %v2268 = vrcp.pop %v2267
        %v2269 = vmul.f32 1.0, %v2268
        %2271 = vset.pattern.permute.xlu0 0
        %2272 = vperm.xlu0 %2271, %v2269
        %v2273 = vpop.permute.xlu0 %2272
        %2275 = vst [vmem:[%s20] sm:$0x3] %v2273
      $region108: #{reranker_regressor_forward.1} parent=99 // pred_fallthru
        _
      // Predicated region
      $region109: #{reranker_regressor_forward.1} parent=99 // pred_check
        %p2276 = pneg %p546
      $region110: #{reranker_regressor_forward.1} parent=99 // pred_check_branch
        %2278 = sbr.rel (%p2276) target = $region112
      $region111: #{reranker_regressor_forward.1} parent=99 // pred_region
        _
      $region112: #{reranker_regressor_forward.1} parent=99 // pred_fallthru
        _
      // Predicated region
      $region113: #{reranker_regressor_forward.1} parent=99 // pred_check
        %p2279 = pneg %p546
      $region114: #{reranker_regressor_forward.1} parent=99 // pred_check_branch
        %2281 = sbr.rel (%p2279) target = $region116
      $region115: #{reranker_regressor_forward.1} parent=99 // pred_region
        _
      $region116: #{reranker_regressor_forward.1} parent=99 // pred_fallthru
        _
    $region100: #{reranker_regressor_forward.1} parent=5 // pred_fallthru
      _
    %p2282 = scmp.le.s32.totalorder 2, %s28
    // Predicated region
    $region117: #{reranker_regressor_forward.1} parent=5 // pred_check
      %p2283 = pneg %p2282
    $region118: #{reranker_regressor_forward.1} parent=5 // pred_check_branch
      %2285 = sbr.rel (%p2283) target = $region120
    $region119: #{reranker_regressor_forward.1} parent=5 // pred_region
      %s2286 = ssub.s32 %s28, 2
    $region120: #{reranker_regressor_forward.1} parent=5 // pred_fallthru
      _
  $region6: #{reranker_regressor_forward.1} parent=0 // loop_footer
    %s32 = sadd.s32 1, %s28
  $region7: #{reranker_regressor_forward.1} parent=0 // loop_footer_branch
    %27 = sbr.rel target = $region3
  $region8: #{reranker_regressor_forward.1} parent=0 // loop_exit
    _

</llo_original>
